<compile_context>
chip_gen: v5e
topology: v5e:2x2
jax: 0.10.0
libtpu: 0.0.40
codegen_flags: <defaults>
</compile_context>

<pallas_src>
import functools
import math

import jax
import jax.numpy as jnp
from jax import lax
from jax.experimental import pallas as pl
from jax.experimental.pallas import tpu as pltpu

_VMEM_LIMIT = 48 * 1024 * 1024   # explicit scoped-VMEM budget (default is 16/32 MiB)
_LN_EPS = 1e-5                   # nn.LayerNorm default eps


def _layernorm_f32(x, gamma, beta):
    mu = jnp.mean(x, axis=-1, keepdims=True)
    var = jnp.mean((x - mu) ** 2, axis=-1, keepdims=True)
    return (x - mu) * lax.rsqrt(var + _LN_EPS) * gamma + beta


# --------------------------- kernel 1: LN1 + QKV projection ---------------------------
def qkv_kernel(x_ref, g_ref, b_ref, wqkv_ref, bqkv_ref, q_ref, k_ref, v_ref, *, scale):
    x = x_ref[0].astype(jnp.float32)                       # (tq, C)
    C = x.shape[-1]
    xn = _layernorm_f32(x, g_ref[0], b_ref[0]).astype(jnp.bfloat16)
    qkv = jnp.dot(xn, wqkv_ref[...], preferred_element_type=jnp.float32) + bqkv_ref[0]
    q_ref[0] = (qkv[:, :C] * scale).astype(q_ref.dtype)    # fold 1/sqrt(hd) into q once
    k_ref[0] = qkv[:, C:2 * C].astype(k_ref.dtype)
    v_ref[0] = qkv[:, 2 * C:].astype(v_ref.dtype)


# ---------------- kernel 2: flash-style causal attention (one head per grid step) -----
def attn_kernel(q_ref, k_ref, v_ref, o_ref, m_sc, l_sc, acc_sc):
    qi = pl.program_id(2)
    ki = pl.program_id(3)
    tq = q_ref.shape[1]
    tk = k_ref.shape[1]

    @pl.when(ki == 0)
    def _init():
        m_sc[...] = jnp.full(m_sc.shape, -jnp.inf, jnp.float32)
        l_sc[...] = jnp.zeros(l_sc.shape, jnp.float32)
        acc_sc[...] = jnp.zeros(acc_sc.shape, jnp.float32)

    @pl.when(ki <= qi)          # causal: skip fully-masked (future) KV tiles entirely
    def _compute():
        q = q_ref[0]            # (tq, hd) bf16, pre-scaled
        k = k_ref[0]            # (tk, hd) bf16
        # contract over head_dim directly (no explicit transpose)
        s = lax.dot_general(q, k, (((1,), (1,)), ((), ())),
                            preferred_element_type=jnp.float32)          # (tq, tk) f32
        row = qi * tq + lax.broadcasted_iota(jnp.int32, (tq, tk), 0)
        col = ki * tk + lax.broadcasted_iota(jnp.int32, (tq, tk), 1)
        s = jnp.where(col <= row, s, -1e30)

        m_prev = m_sc[...]
        m_new = jnp.maximum(m_prev, jnp.max(s, axis=-1, keepdims=True))
        alpha = jnp.exp(m_prev - m_new)
        p = jnp.exp(s - m_new)
        l_sc[...] = alpha * l_sc[...] + jnp.sum(p, axis=-1, keepdims=True)
        acc_sc[...] = alpha * acc_sc[...] + jnp.dot(
            p.astype(jnp.bfloat16), v_ref[0], preferred_element_type=jnp.float32)
        m_sc[...] = m_new

    @pl.when(ki == pl.num_programs(3) - 1)
    def _finalize():
        o_ref[0] = (acc_sc[...] *
                    pl.reciprocal(l_sc[...], approx=True)).astype(o_ref.dtype)


# ------------- kernel 3: attention out-proj + residual + LN2 + MLP + residual ---------
def proj_mlp_kernel(x_ref, y_ref, wpr_ref, bpr_ref, g2_ref, b2_ref,
                    wfc_ref, bfc_ref, wp2_ref, bp2_ref, o_ref):
    x = x_ref[0].astype(jnp.float32)                       # (tq, C) residual stream
    y = y_ref[0]                                           # (tq, C) bf16 attention heads
    x1 = x + jnp.dot(y, wpr_ref[...], preferred_element_type=jnp.float32) + bpr_ref[0]

    xn = _layernorm_f32(x1, g2_ref[0], b2_ref[0]).astype(jnp.bfloat16)

    # Chunk the 4C hidden dim so h1 is never fully resident.
    dff = wfc_ref.shape[1]
    dff_chunk = 512 if dff % 512 == 0 else dff
    acc = jnp.zeros(x1.shape, jnp.float32)
    for j in range(dff // dff_chunk):                      # static, small trip count
        sl = pl.ds(j * dff_chunk, dff_chunk)
        h = jnp.dot(xn, wfc_ref[:, sl], preferred_element_type=jnp.float32) + bfc_ref[0, sl]
        h = jax.nn.gelu(h, approximate=True).astype(jnp.bfloat16)
        acc = acc + jnp.dot(h, wp2_ref[sl, :], preferred_element_type=jnp.float32)
    o_ref[0] = (x1 + acc + bp2_ref[0]).astype(o_ref.dtype)


# ------------------------------------ wrapper -----------------------------------------
def _const_spec(a):
    n = a.ndim
    return pl.BlockSpec(a.shape, lambda *_, n=n: (0,) * n)


def block_forward(x, params, n_head, *, tq=128, tk=128):
    (ln1_g, ln1_b, wqkv, bqkv, wpr, bpr,
     ln2_g, ln2_b, wfc, bfc, wp2, bp2) = params
    B, T, C = x.shape
    assert C % n_head == 0
    hd = C // n_head
    assert T % tq == 0 and T % tk == 0
    assert C % 128 == 0, "embedding dim must be lane-aligned (multiple of 128)"
    # TODO(synk): support head_dim not a multiple of 128 (e.g. GPT-2 hd=64) by grouping
    # several heads per attention block instead of one head per grid step.
    assert hd % 128 == 0, "head_dim must be a multiple of 128 for per-head BlockSpecs"
    # TODO(synk): for very large C on v7x (64 MiB VMEM), additionally tile wfc/wp2 along
    # the contraction dim via a grid axis instead of keeping them fully resident.

    bf16 = jnp.bfloat16
    # MXU operands in bf16 (f32 accumulation); biases / LN params stay f32.
    wqkv_b = wqkv.astype(bf16)
    wpr_b = wpr.astype(bf16)
    wfc_b = wfc.astype(bf16)
    wp2_b = wp2.astype(bf16)

    nq, nk = T // tq, T // tk

    # ---- 1) LN1 + QKV projection -------------------------------------------------
    q, k, v = pl.pallas_call(
        functools.partial(qkv_kernel, scale=1.0 / math.sqrt(hd)),
        out_shape=(jax.ShapeDtypeStruct((B, T, C), bf16),) * 3,
        grid=(B, nq),
        in_specs=[pl.BlockSpec((1, tq, C), lambda b, i: (b, i, 0)),
                  _const_spec(ln1_g), _const_spec(ln1_b),
                  _const_spec(wqkv_b), _const_spec(bqkv)],
        out_specs=(pl.BlockSpec((1, tq, C), lambda b, i: (b, i, 0)),) * 3,
        compiler_params=pltpu.CompilerParams(
            dimension_semantics=("parallel", "parallel"),
            vmem_limit_bytes=_VMEM_LIMIT),
    )(x, ln1_g, ln1_b, wqkv_b, bqkv)

    # ---- 2) flash attention over (batch, head, q-tile, kv-tile) -------------------
    y = pl.pallas_call(
        attn_kernel,
        out_shape=jax.ShapeDtypeStruct((B, T, C), bf16),
        grid=(B, n_head, nq, nk),
        in_specs=[pl.BlockSpec((1, tq, hd), lambda b, h, qi, ki: (b, qi, h)),
                  pl.BlockSpec((1, tk, hd), lambda b, h, qi, ki: (b, ki, h)),
                  pl.BlockSpec((1, tk, hd), lambda b, h, qi, ki: (b, ki, h))],
        out_specs=pl.BlockSpec((1, tq, hd), lambda b, h, qi, ki: (b, qi, h)),
        scratch_shapes=[pltpu.VMEM((tq, 1), jnp.float32),
                        pltpu.VMEM((tq, 1), jnp.float32),
                        pltpu.VMEM((tq, hd), jnp.float32)],
        compiler_params=pltpu.CompilerParams(
            dimension_semantics=("parallel", "parallel", "parallel", "arbitrary"),
            vmem_limit_bytes=_VMEM_LIMIT),
    )(q, k, v)

    # ---- 3) attention out-proj + residual + LN2 + MLP + residual ------------------
    out = pl.pallas_call(
        proj_mlp_kernel,
        out_shape=jax.ShapeDtypeStruct((B, T, C), x.dtype),
        grid=(B, nq),
        in_specs=[pl.BlockSpec((1, tq, C), lambda b, i: (b, i, 0)),
                  pl.BlockSpec((1, tq, C), lambda b, i: (b, i, 0)),
                  _const_spec(wpr_b), _const_spec(bpr),
                  _const_spec(ln2_g), _const_spec(ln2_b),
                  _const_spec(wfc_b), _const_spec(bfc),
                  _const_spec(wp2_b), _const_spec(bp2)],
        out_specs=pl.BlockSpec((1, tq, C), lambda b, i: (b, i, 0)),
        compiler_params=pltpu.CompilerParams(
            dimension_semantics=("parallel", "parallel"),
            vmem_limit_bytes=_VMEM_LIMIT),
    )(x, y, wpr_b, bpr, ln2_g, ln2_b, wfc_b, bfc, wp2_b, bp2)
    return out


# ------------------------------- pure-JAX reference -----------------------------------
def block_reference(x, params, n_head):
    (ln1_g, ln1_b, wqkv, bqkv, wpr, bpr,
     ln2_g, ln2_b, wfc, bfc, wp2, bp2) = params
    B, T, C = x.shape
    hd = C // n_head

    def ln(v, g, b):
        mu = jnp.mean(v, axis=-1, keepdims=True)
        var = jnp.mean((v - mu) ** 2, axis=-1, keepdims=True)
        return (v - mu) / jnp.sqrt(var + _LN_EPS) * g[0] + b[0]

    xn = ln(x, ln1_g, ln1_b)
    qkv = xn @ wqkv + bqkv[0]
    q, k, v = jnp.split(qkv, 3, axis=-1)
    q = q.reshape(B, T, n_head, hd).transpose(0, 2, 1, 3)
    k = k.reshape(B, T, n_head, hd).transpose(0, 2, 1, 3)
    v = v.reshape(B, T, n_head, hd).transpose(0, 2, 1, 3)
    s = jnp.einsum('bhqd,bhkd->bhqk', q, k) / jnp.sqrt(hd)
    mask = jnp.tril(jnp.ones((T, T), bool))
    s = jnp.where(mask, s, -1e30)
    p = jax.nn.softmax(s, axis=-1)
    y = jnp.einsum('bhqk,bhkd->bhqd', p, v)
    y = y.transpose(0, 2, 1, 3).reshape(B, T, C)
    x = x + (y @ wpr + bpr[0])

    xn2 = ln(x, ln2_g, ln2_b)
    h1 = jax.nn.gelu(xn2 @ wfc + bfc[0], approximate=True)
    x = x + (h1 @ wp2 + bp2[0])
    return x


if __name__ == "__main__":
    # Small config (lane-aligned): batch=2, seq=256, n_embd=256, n_head=2 -> head_dim=128
    B, T, C, n_head = 2, 256, 256, 2

    key = jax.random.PRNGKey(0)
    ks = jax.random.split(key, 16)
    s = 0.02

    # Deterministic synthetic parameters (Linear weights stored as (in, out)).
    ln1_g = 1.0 + 0.1 * jax.random.normal(ks[9], (1, C), jnp.float32)
    ln1_b = 0.1 * jax.random.normal(ks[10], (1, C), jnp.float32)
    wqkv = s * jax.random.normal(ks[0], (C, 3 * C), jnp.float32)
    bqkv = s * jax.random.normal(ks[1], (1, 3 * C), jnp.float32)
    wpr = s * jax.random.normal(ks[2], (C, C), jnp.float32)
    bpr = s * jax.random.normal(ks[3], (1, C), jnp.float32)
    ln2_g = 1.0 + 0.1 * jax.random.normal(ks[11], (1, C), jnp.float32)
    ln2_b = 0.1 * jax.random.normal(ks[12], (1, C), jnp.float32)
    wfc = s * jax.random.normal(ks[4], (C, 4 * C), jnp.float32)
    bfc = s * jax.random.normal(ks[5], (1, 4 * C), jnp.float32)
    wp2 = s * jax.random.normal(ks[6], (4 * C, C), jnp.float32)
    bp2 = s * jax.random.normal(ks[7], (1, C), jnp.float32)

    params = (ln1_g, ln1_b, wqkv, bqkv, wpr, bpr,
              ln2_g, ln2_b, wfc, bfc, wp2, bp2)

    x = jax.random.normal(ks[8], (B, T, C), jnp.float32)

    out = block_forward(x, params, n_head, tq=128, tk=128)
    out = jax.block_until_ready(out)

    ref = block_reference(x, params, n_head)
    # bf16 MXU operands + approx reciprocal -> loose-but-meaningful tolerance vs f32 ref.
    if not bool(jnp.allclose(out, ref, atol=1e-2, rtol=1e-2)):
        raise AssertionError("Pallas Block output does not match reference")

    print("KERNEL_OK")
</pallas_src>

<mosaic_0001>
module attributes {stable_mosaic.version = 11 : i64} {
  func.func @qkv_kernel(%arg0: i32, %arg1: i32, %arg2: memref<1x128x256xf32, #tpu.memory_space<vmem>>, %arg3: memref<1x256xf32, #tpu.memory_space<vmem>>, %arg4: memref<1x256xf32, #tpu.memory_space<vmem>>, %arg5: memref<256x768xbf16, #tpu.memory_space<vmem>>, %arg6: memref<1x768xf32, #tpu.memory_space<vmem>>, %arg7: memref<1x128x256xbf16, #tpu.memory_space<vmem>>, %arg8: memref<1x128x256xbf16, #tpu.memory_space<vmem>>, %arg9: memref<1x128x256xbf16, #tpu.memory_space<vmem>>) attributes {dimension_semantics = [#tpu.dimension_semantics<parallel>, #tpu.dimension_semantics<parallel>], iteration_bounds = array<i64: 2, 2>, scalar_prefetch = 0 : i64, scratch_operands = 0 : i64, tpu.core_type = #tpu.core_type<tc>, window_params = [{transform_indices = @transform_0, window_bounds = array<i64: 1, 128, 256>}, {pipeline_mode = #tpu.pipeline_mode<synchronous>, transform_indices = @transform_1, window_bounds = array<i64: 1, 256>}, {pipeline_mode = #tpu.pipeline_mode<synchronous>, transform_indices = @transform_2, window_bounds = array<i64: 1, 256>}, {pipeline_mode = #tpu.pipeline_mode<synchronous>, transform_indices = @transform_3, window_bounds = array<i64: 256, 768>}, {pipeline_mode = #tpu.pipeline_mode<synchronous>, transform_indices = @transform_4, window_bounds = array<i64: 1, 768>}, {transform_indices = @transform_5, window_bounds = array<i64: 1, 128, 256>}, {transform_indices = @transform_6, window_bounds = array<i64: 1, 128, 256>}, {transform_indices = @transform_7, window_bounds = array<i64: 1, 128, 256>}]} {
    %c0 = arith.constant 0 : index
    %c0_0 = arith.constant 0 : index
    %c0_1 = arith.constant 0 : index
    %0 = vector.load %arg2[%c0, %c0_0, %c0_1] : memref<1x128x256xf32, #tpu.memory_space<vmem>>, vector<1x128x256xf32>
    %1 = vector.shape_cast %0 : vector<1x128x256xf32> to vector<128x256xf32>
    %c0_2 = arith.constant 0 : index
    %c0_3 = arith.constant 0 : index
    %2 = vector.load %arg3[%c0_2, %c0_3] : memref<1x256xf32, #tpu.memory_space<vmem>>, vector<1x256xf32>
    %3 = vector.shape_cast %2 : vector<1x256xf32> to vector<256xf32>
    %c0_4 = arith.constant 0 : index
    %c0_5 = arith.constant 0 : index
    %4 = vector.load %arg4[%c0_4, %c0_5] : memref<1x256xf32, #tpu.memory_space<vmem>>, vector<1x256xf32>
    %5 = vector.shape_cast %4 : vector<1x256xf32> to vector<256xf32>
    %cst = arith.constant dense<0.000000e+00> : vector<128xf32>
    %6 = vector.multi_reduction <add>, %1, %cst [1] : vector<128x256xf32> to vector<128xf32>
    %7 = vector.shape_cast %6 : vector<128xf32> to vector<128x1xf32>
    %cst_6 = arith.constant 2.560000e+02 : f32
    %8 = vector.broadcast %cst_6 : f32 to vector<128x1xf32>
    %9 = arith.divf %7, %8 : vector<128x1xf32>
    %10 = vector.broadcast %9 : vector<128x1xf32> to vector<128x256xf32>
    %11 = arith.subf %1, %10 : vector<128x256xf32>
    %12 = arith.mulf %11, %11 : vector<128x256xf32>
    %cst_7 = arith.constant dense<0.000000e+00> : vector<128xf32>
    %13 = vector.multi_reduction <add>, %12, %cst_7 [1] : vector<128x256xf32> to vector<128xf32>
    %14 = vector.shape_cast %13 : vector<128xf32> to vector<128x1xf32>
    %cst_8 = arith.constant 2.560000e+02 : f32
    %15 = vector.broadcast %cst_8 : f32 to vector<128x1xf32>
    %16 = arith.divf %14, %15 : vector<128x1xf32>
    %17 = vector.broadcast %9 : vector<128x1xf32> to vector<128x256xf32>
    %18 = arith.subf %1, %17 : vector<128x256xf32>
    %cst_9 = arith.constant 9.99999974E-6 : f32
    %19 = vector.broadcast %cst_9 : f32 to vector<128x1xf32>
    %20 = arith.addf %16, %19 : vector<128x1xf32>
    %21 = math.rsqrt %20 : vector<128x1xf32>
    %22 = vector.broadcast %21 : vector<128x1xf32> to vector<128x256xf32>
    %23 = arith.mulf %18, %22 : vector<128x256xf32>
    %24 = vector.shape_cast %3 : vector<256xf32> to vector<1x256xf32>
    %25 = vector.broadcast %24 : vector<1x256xf32> to vector<128x256xf32>
    %26 = arith.mulf %23, %25 : vector<128x256xf32>
    %27 = vector.shape_cast %5 : vector<256xf32> to vector<1x256xf32>
    %28 = vector.broadcast %27 : vector<1x256xf32> to vector<128x256xf32>
    %29 = arith.addf %26, %28 : vector<128x256xf32>
    %30 = arith.truncf %29 : vector<128x256xf32> to vector<128x256xbf16>
    %c0_10 = arith.constant 0 : index
    %c0_11 = arith.constant 0 : index
    %31 = vector.load %arg5[%c0_10, %c0_11] : memref<256x768xbf16, #tpu.memory_space<vmem>>, vector<256x768xbf16>
    %cst_12 = arith.constant dense<0.000000e+00> : vector<128x768xf32>
    %32 = tpu.matmul %30, %31, %cst_12 {dimension_numbers = #tpu.dot_dimension_numbers<[1], [0], [0], [1], [0, 0, 1, 1], [], []>} : vector<128x256xbf16>, vector<256x768xbf16>, vector<128x768xf32> -> vector<128x768xf32>
    %c0_13 = arith.constant 0 : index
    %c0_14 = arith.constant 0 : index
    %33 = vector.load %arg6[%c0_13, %c0_14] : memref<1x768xf32, #tpu.memory_space<vmem>>, vector<1x768xf32>
    %34 = vector.shape_cast %33 : vector<1x768xf32> to vector<768xf32>
    %35 = vector.shape_cast %34 : vector<768xf32> to vector<1x768xf32>
    %36 = vector.broadcast %35 : vector<1x768xf32> to vector<128x768xf32>
    %37 = arith.addf %32, %36 : vector<128x768xf32>
    %38 = vector.extract_strided_slice %37 {offsets = [0, 0], sizes = [128, 256], strides = [1, 1]} : vector<128x768xf32> to vector<128x256xf32>
    %cst_15 = arith.constant 0.0883883461 : f32
    %39 = vector.broadcast %cst_15 : f32 to vector<128x256xf32>
    %40 = arith.mulf %38, %39 : vector<128x256xf32>
    %41 = arith.truncf %40 : vector<128x256xf32> to vector<128x256xbf16>
    %c0_16 = arith.constant 0 : index
    %c0_17 = arith.constant 0 : index
    %c0_18 = arith.constant 0 : index
    %42 = vector.load %arg7[%c0_16, %c0_17, %c0_18] : memref<1x128x256xbf16, #tpu.memory_space<vmem>>, vector<1x128x256xbf16>
    %43 = vector.shape_cast %42 : vector<1x128x256xbf16> to vector<128x256xbf16>
    %44 = vector.shape_cast %41 : vector<128x256xbf16> to vector<1x128x256xbf16>
    tpu.vector_store %arg7[%c0_16, %c0_17, %c0_18], %44 {strides = array<i32>} : memref<1x128x256xbf16, #tpu.memory_space<vmem>>, vector<1x128x256xbf16>,
    %45 = vector.extract_strided_slice %37 {offsets = [0, 256], sizes = [128, 256], strides = [1, 1]} : vector<128x768xf32> to vector<128x256xf32>
    %46 = arith.truncf %45 : vector<128x256xf32> to vector<128x256xbf16>
    %c0_19 = arith.constant 0 : index
    %c0_20 = arith.constant 0 : index
    %c0_21 = arith.constant 0 : index
    %47 = vector.load %arg8[%c0_19, %c0_20, %c0_21] : memref<1x128x256xbf16, #tpu.memory_space<vmem>>, vector<1x128x256xbf16>
    %48 = vector.shape_cast %47 : vector<1x128x256xbf16> to vector<128x256xbf16>
    %49 = vector.shape_cast %46 : vector<128x256xbf16> to vector<1x128x256xbf16>
    tpu.vector_store %arg8[%c0_19, %c0_20, %c0_21], %49 {strides = array<i32>} : memref<1x128x256xbf16, #tpu.memory_space<vmem>>, vector<1x128x256xbf16>,
    %50 = vector.extract_strided_slice %37 {offsets = [0, 512], sizes = [128, 256], strides = [1, 1]} : vector<128x768xf32> to vector<128x256xf32>
    %51 = arith.truncf %50 : vector<128x256xf32> to vector<128x256xbf16>
    %c0_22 = arith.constant 0 : index
    %c0_23 = arith.constant 0 : index
    %c0_24 = arith.constant 0 : index
    %52 = vector.load %arg9[%c0_22, %c0_23, %c0_24] : memref<1x128x256xbf16, #tpu.memory_space<vmem>>, vector<1x128x256xbf16>
    %53 = vector.shape_cast %52 : vector<1x128x256xbf16> to vector<128x256xbf16>
    %54 = vector.shape_cast %51 : vector<128x256xbf16> to vector<1x128x256xbf16>
    tpu.vector_store %arg9[%c0_22, %c0_23, %c0_24], %54 {strides = array<i32>} : memref<1x128x256xbf16, #tpu.memory_space<vmem>>, vector<1x128x256xbf16>,
    return
  }
  func.func @transform_0(%arg0: i32, %arg1: i32) -> (i32, i32, i32) {
    %c0_i32 = arith.constant 0 : i32
    %c0_i32_0 = arith.constant 0 : i32
    return %arg0, %arg1, %c0_i32 : i32, i32, i32
  }
  func.func @transform_1(%arg0: i32, %arg1: i32) -> (i32, i32) {
    %c0_i32 = arith.constant 0 : i32
    %c0_i32_0 = arith.constant 0 : i32
    %c0_i32_1 = arith.constant 0 : i32
    return %c0_i32, %c0_i32_0 : i32, i32
  }
  func.func @transform_2(%arg0: i32, %arg1: i32) -> (i32, i32) {
    %c0_i32 = arith.constant 0 : i32
    %c0_i32_0 = arith.constant 0 : i32
    %c0_i32_1 = arith.constant 0 : i32
    return %c0_i32, %c0_i32_0 : i32, i32
  }
  func.func @transform_3(%arg0: i32, %arg1: i32) -> (i32, i32) {
    %c0_i32 = arith.constant 0 : i32
    %c0_i32_0 = arith.constant 0 : i32
    %c0_i32_1 = arith.constant 0 : i32
    return %c0_i32, %c0_i32_0 : i32, i32
  }
  func.func @transform_4(%arg0: i32, %arg1: i32) -> (i32, i32) {
    %c0_i32 = arith.constant 0 : i32
    %c0_i32_0 = arith.constant 0 : i32
    %c0_i32_1 = arith.constant 0 : i32
    return %c0_i32, %c0_i32_0 : i32, i32
  }
  func.func @transform_5(%arg0: i32, %arg1: i32) -> (i32, i32, i32) {
    %c0_i32 = arith.constant 0 : i32
    %c0_i32_0 = arith.constant 0 : i32
    return %arg0, %arg1, %c0_i32 : i32, i32, i32
  }
  func.func @transform_6(%arg0: i32, %arg1: i32) -> (i32, i32, i32) {
    %c0_i32 = arith.constant 0 : i32
    %c0_i32_0 = arith.constant 0 : i32
    return %arg0, %arg1, %c0_i32 : i32, i32, i32
  }
  func.func @transform_7(%arg0: i32, %arg1: i32) -> (i32, i32, i32) {
    %c0_i32 = arith.constant 0 : i32
    %c0_i32_0 = arith.constant 0 : i32
    return %arg0, %arg1, %c0_i32 : i32, i32, i32
  }
}

</mosaic_0001>

<llo_original>
// kernel: tpu_custom_call.1
$region0: #{tpu_custom_call.1}
  #allocation0 [shape = 'u32[]', space=smem, size = 0x4, offset = 0x4, fixed_abs, tag = 'smem constant byte address 0x4 - core index']
  #allocation1 [shape = 'u32[72,128]{1,0:T(1,128)}', space=vmem, size = 0x9000, scoped, tag = 'internal scratch']
  %s0 = inlined_call_operand.hbm [shape: f32[2,256,256], index: 0, kind: input, shape index: {}]
  %s1 = inlined_call_operand.hbm [shape: f32[1,256], index: 1, kind: input, shape index: {}]
  %s2 = inlined_call_operand.hbm [shape: f32[1,256], index: 2, kind: input, shape index: {}]
  %s3 = inlined_call_operand.hbm [shape: bf16[256,768], index: 3, kind: input, shape index: {}]
  %s4 = inlined_call_operand.hbm [shape: f32[1,768], index: 4, kind: input, shape index: {}]
  %s5 = inlined_call_operand.hbm [shape: bf16[2,256,256], index: 5, kind: output, shape index: {0}]
  %s6 = inlined_call_operand.hbm [shape: bf16[2,256,256], index: 6, kind: output, shape index: {1}]
  %s7 = inlined_call_operand.hbm [shape: bf16[2,256,256], index: 7, kind: output, shape index: {2}]
  %8 = xla_tuple %s5, %s6, %s7
  %s9 = sld [smem:[#allocation0]]
  $region89: #{tpu_custom_call.1} parent=0
    _
  %s11 = ssub.s32 1, %s9
  %s12 = scalar_select 0, %s11, %s9
  $region1: #{tpu_custom_call.1} parent=0
    #allocation2 [shape = 'u8[262144]{0}', space=vmem, size = 0x40000, scoped, tag = 'input window, operand 0']
    #allocation3 [shape = 's32[2]{0}', space=sflag, size = 0x8, scoped, tag = 'scoped memory for tpu_custom_call.1']
    #allocation4 [shape = 's32[2]{0}', space=sflag, size = 0x8, scoped, tag = 'scoped memory for tpu_custom_call.1']
    #allocation5 [shape = 'u8[1024]{0}', space=vmem, size = 0x400, scoped, tag = 'input window, operand 1, single buffered']
    #allocation6 [shape = 's32[1]{0}', space=sflag, size = 0x4, scoped, tag = 'scoped memory for tpu_custom_call.1']
    #allocation7 [shape = 'u8[1024]{0}', space=vmem, size = 0x400, scoped, tag = 'input window, operand 2, single buffered']
    #allocation8 [shape = 'u8[393216]{0}', space=vmem, size = 0x60000, scoped, tag = 'input window, operand 3, single buffered']
    #allocation9 [shape = 's32[1]{0}', space=sflag, size = 0x4, scoped, tag = 'scoped memory for tpu_custom_call.1']
    #allocation10 [shape = 'u8[3072]{0}', space=vmem, size = 0xc00, scoped, tag = 'input window, operand 4, single buffered']
    #allocation11 [shape = 'u8[131072]{0}', space=vmem, size = 0x20000, scoped, tag = 'output window, operand 0']
    #allocation12 [shape = 'u8[131072]{0}', space=vmem, size = 0x20000, scoped, tag = 'output window, operand 1']
    #allocation13 [shape = 's32[2]{0}', space=sflag, size = 0x8, scoped, tag = 'scoped memory for tpu_custom_call.1']
    #allocation14 [shape = 'u8[131072]{0}', space=vmem, size = 0x20000, scoped, tag = 'output window, operand 2']
    %13 = vsyncpa [#allocation3], 0
    %s14 = scalar_lea.sflag [#allocation3], 1
    %15 = vsyncpa %s14, 0
    %16 = vsyncpa [#allocation6], 0
    %17 = vsyncpa [#allocation9], 0
    %18 = vsyncpa [#allocation4], 0
    %s19 = scalar_lea.sflag [#allocation4], 1
    %20 = vsyncpa %s19, 0
    %21 = vsyncpa [#allocation13], 0
    %s22 = scalar_lea.sflag [#allocation13], 1
    %23 = vsyncpa %s22, 0
    loop: start=0, step=1, limit=6
    $region2: #{tpu_custom_call.1} parent=1 // loop_pre_header
      _
    $region3: #{tpu_custom_call.1} parent=1 // loop_header
      %s25 = sphi 0, %s29
      %p26 = scmp.ge.s32.totalorder %s25, 6
      %s32 = sphi 0, %s44
      %s33 = sphi 0, %s40
      %s34 = sphi 0, %s32
      %s35 = sphi 0, %s33
      %s36 = sphi 0, %s34
      %s37 = sphi 0, %s35
      %s49 = sphi 0, %s51
      %s52 = sphi 0, %s49
      %s53 = sphi 0, %s52
      %s69 = sphi 0, %s53
      %s73 = sphi 0, %s73
      %s75 = sphi 0, %s73
      %s76 = sphi 0, %s75
      %s90 = sphi 0, %s76
      %s94 = sphi 0, %s94
      %s96 = sphi 0, %s94
      %s97 = sphi 0, %s96
      %s111 = sphi 0, %s97
      %s115 = sphi 0, %s115
      %s117 = sphi 0, %s115
      %s118 = sphi 0, %s117
      %s132 = sphi 0, %s118
      %s136 = sphi 0, %s136
      %s138 = sphi 0, %s136
      %s139 = sphi 0, %s138
      %s153 = sphi 0, %s139
      %s161 = sphi 0, %s163
      %s164 = sphi 0, %s161
      %s165 = sphi 0, %s164
      %s181 = sphi 0, %s165
      %s189 = sphi 0, %s191
      %s192 = sphi 0, %s189
      %s193 = sphi 0, %s192
      %s209 = sphi 0, %s193
      %s217 = sphi 0, %s219
      %s220 = sphi 0, %s217
      %s221 = sphi 0, %s220
      %s237 = sphi 0, %s221
    $region4: #{tpu_custom_call.1} parent=1 // loop_header_branch
      %28 = sbr.rel (%p26) target = $region8
    $region5: #{tpu_custom_call.1} parent=1 // loop_body
      %s30 = ssub.s32 %s25, 1
      %s31 = ssub.s32 %s25, 2
      %s38 = sadd.s32 1, %s33
      %p39 = scmp.ge.s32.totalorder %s38, 2
      %s40 = scalar_select %p39, 0, %s38
      %s41 = sadd.s32 1, %s32
      %s42 = scalar_select %p39, %s41, %s32
      %p43 = scmp.ge.s32.totalorder %s42, 2
      %s44 = scalar_select %p43, 0, %s42
      %s45 = ssub.s32 %s32, %s44
      %s46 = ssub.s32 %s33, %s40
      %s47 = sor.u32 %s45, %s46
      %p48 = scmp.eq.s32.totalorder %s47, 0
      %s50 = sadd.s32 %s49, 1
      %s51 = scalar_select %p48, %s49, %s50
      %p54 = pneg %p48
      %p55 = scmp.eq.s32.totalorder %s25, 3
      %p56 = por %p54, %p55
      %p57 = scmp.ne.s32.totalorder %s49, %s52
      %p58 = scmp.eq.s32.totalorder %s25, 0
      %p59 = por %p57, %p58
      %p60 = scmp.ne.s32.totalorder %s49, %s52
      %p61 = scmp.eq.s32.totalorder %s30, 3
      %p62 = por %p60, %p61
      %p63 = scmp.ne.s32.totalorder %s52, %s53
      %p64 = scmp.eq.s32.totalorder %s30, 0
      %p65 = por %p63, %p64
      %p66 = scmp.ne.s32.totalorder %s52, %s53
      %p67 = scmp.eq.s32.totalorder %s31, 3
      %p68 = por %p66, %p67
      %p70 = scmp.ne.s32.totalorder %s53, %s69
      %p71 = scmp.eq.s32.totalorder %s31, 0
      %p72 = por %p70, %p71
      %s74 = sadd.s32 %s73, 1
      %p77 = scmp.eq.s32.totalorder %s25, 3
      %p78 = scmp.ne.s32.totalorder %s73, %s75
      %p79 = scmp.eq.s32.totalorder %s25, 0
      %p80 = por %p78, %p79
      %p81 = scmp.ne.s32.totalorder %s73, %s75
      %p82 = scmp.eq.s32.totalorder %s30, 3
      %p83 = por %p81, %p82
      %p84 = scmp.ne.s32.totalorder %s75, %s76
      %p85 = scmp.eq.s32.totalorder %s30, 0
      %p86 = por %p84, %p85
      %p87 = scmp.ne.s32.totalorder %s75, %s76
      %p88 = scmp.eq.s32.totalorder %s31, 3
      %p89 = por %p87, %p88
      %p91 = scmp.ne.s32.totalorder %s76, %s90
      %p92 = scmp.eq.s32.totalorder %s31, 0
      %p93 = por %p91, %p92
      %s95 = sadd.s32 %s94, 1
      %p98 = scmp.eq.s32.totalorder %s25, 3
      %p99 = scmp.ne.s32.totalorder %s94, %s96
      %p100 = scmp.eq.s32.totalorder %s25, 0
      %p101 = por %p99, %p100
      %p102 = scmp.ne.s32.totalorder %s94, %s96
      %p103 = scmp.eq.s32.totalorder %s30, 3
      %p104 = por %p102, %p103
      %p105 = scmp.ne.s32.totalorder %s96, %s97
      %p106 = scmp.eq.s32.totalorder %s30, 0
      %p107 = por %p105, %p106
      %p108 = scmp.ne.s32.totalorder %s96, %s97
      %p109 = scmp.eq.s32.totalorder %s31, 3
      %p110 = por %p108, %p109
      %p112 = scmp.ne.s32.totalorder %s97, %s111
      %p113 = scmp.eq.s32.totalorder %s31, 0
      %p114 = por %p112, %p113
      %s116 = sadd.s32 %s115, 1
      %p119 = scmp.eq.s32.totalorder %s25, 3
      %p120 = scmp.ne.s32.totalorder %s115, %s117
      %p121 = scmp.eq.s32.totalorder %s25, 0
      %p122 = por %p120, %p121
      %p123 = scmp.ne.s32.totalorder %s115, %s117
      %p124 = scmp.eq.s32.totalorder %s30, 3
      %p125 = por %p123, %p124
      %p126 = scmp.ne.s32.totalorder %s117, %s118
      %p127 = scmp.eq.s32.totalorder %s30, 0
      %p128 = por %p126, %p127
      %p129 = scmp.ne.s32.totalorder %s117, %s118
      %p130 = scmp.eq.s32.totalorder %s31, 3
      %p131 = por %p129, %p130
      %p133 = scmp.ne.s32.totalorder %s118, %s132
      %p134 = scmp.eq.s32.totalorder %s31, 0
      %p135 = por %p133, %p134
      %s137 = sadd.s32 %s136, 1
      %p140 = scmp.eq.s32.totalorder %s25, 3
      %p141 = scmp.ne.s32.totalorder %s136, %s138
      %p142 = scmp.eq.s32.totalorder %s25, 0
      %p143 = por %p141, %p142
      %p144 = scmp.ne.s32.totalorder %s136, %s138
      %p145 = scmp.eq.s32.totalorder %s30, 3
      %p146 = por %p144, %p145
      %p147 = scmp.ne.s32.totalorder %s138, %s139
      %p148 = scmp.eq.s32.totalorder %s30, 0
      %p149 = por %p147, %p148
      %p150 = scmp.ne.s32.totalorder %s138, %s139
      %p151 = scmp.eq.s32.totalorder %s31, 3
      %p152 = por %p150, %p151
      %p154 = scmp.ne.s32.totalorder %s139, %s153
      %p155 = scmp.eq.s32.totalorder %s31, 0
      %p156 = por %p154, %p155
      %s157 = ssub.s32 %s32, %s44
      %s158 = ssub.s32 %s33, %s40
      %s159 = sor.u32 %s157, %s158
      %p160 = scmp.eq.s32.totalorder %s159, 0
      %s162 = sadd.s32 %s161, 1
      %s163 = scalar_select %p160, %s161, %s162
      %p166 = pneg %p160
      %p167 = scmp.eq.s32.totalorder %s25, 3
      %p168 = por %p166, %p167
      %p169 = scmp.ne.s32.totalorder %s161, %s164
      %p170 = scmp.eq.s32.totalorder %s25, 0
      %p171 = por %p169, %p170
      %p172 = scmp.ne.s32.totalorder %s161, %s164
      %p173 = scmp.eq.s32.totalorder %s30, 3
      %p174 = por %p172, %p173
      %p175 = scmp.ne.s32.totalorder %s164, %s165
      %p176 = scmp.eq.s32.totalorder %s30, 0
      %p177 = por %p175, %p176
      %p178 = scmp.ne.s32.totalorder %s164, %s165
      %p179 = scmp.eq.s32.totalorder %s31, 3
      %p180 = por %p178, %p179
      %p182 = scmp.ne.s32.totalorder %s165, %s181
      %p183 = scmp.eq.s32.totalorder %s31, 0
      %p184 = por %p182, %p183
      %s185 = ssub.s32 %s32, %s44
      %s186 = ssub.s32 %s33, %s40
      %s187 = sor.u32 %s185, %s186
      %p188 = scmp.eq.s32.totalorder %s187, 0
      %s190 = sadd.s32 %s189, 1
      %s191 = scalar_select %p188, %s189, %s190
      %p194 = pneg %p188
      %p195 = scmp.eq.s32.totalorder %s25, 3
      %p196 = por %p194, %p195
      %p197 = scmp.ne.s32.totalorder %s189, %s192
      %p198 = scmp.eq.s32.totalorder %s25, 0
      %p199 = por %p197, %p198
      %p200 = scmp.ne.s32.totalorder %s189, %s192
      %p201 = scmp.eq.s32.totalorder %s30, 3
      %p202 = por %p200, %p201
      %p203 = scmp.ne.s32.totalorder %s192, %s193
      %p204 = scmp.eq.s32.totalorder %s30, 0
      %p205 = por %p203, %p204
      %p206 = scmp.ne.s32.totalorder %s192, %s193
      %p207 = scmp.eq.s32.totalorder %s31, 3
      %p208 = por %p206, %p207
      %p210 = scmp.ne.s32.totalorder %s193, %s209
      %p211 = scmp.eq.s32.totalorder %s31, 0
      %p212 = por %p210, %p211
      %s213 = ssub.s32 %s32, %s44
      %s214 = ssub.s32 %s33, %s40
      %s215 = sor.u32 %s213, %s214
      %p216 = scmp.eq.s32.totalorder %s215, 0
      %s218 = sadd.s32 %s217, 1
      %s219 = scalar_select %p216, %s217, %s218
      %p222 = pneg %p216
      %p223 = scmp.eq.s32.totalorder %s25, 3
      %p224 = por %p222, %p223
      %p225 = scmp.ne.s32.totalorder %s217, %s220
      %p226 = scmp.eq.s32.totalorder %s25, 0
      %p227 = por %p225, %p226
      %p228 = scmp.ne.s32.totalorder %s217, %s220
      %p229 = scmp.eq.s32.totalorder %s30, 3
      %p230 = por %p228, %p229
      %p231 = scmp.ne.s32.totalorder %s220, %s221
      %p232 = scmp.eq.s32.totalorder %s30, 0
      %p233 = por %p231, %p232
      %p234 = scmp.ne.s32.totalorder %s220, %s221
      %p235 = scmp.eq.s32.totalorder %s31, 3
      %p236 = por %p234, %p235
      %p238 = scmp.ne.s32.totalorder %s221, %s237
      %p239 = scmp.eq.s32.totalorder %s31, 0
      %p240 = por %p238, %p239
      %p241 = scmp.le.s32.totalorder 1, %s25
      %p242 = scmp.lt.s32.totalorder %s25, 5
      %p243 = pnand %p241, %p242
      %p244 = pneg %p243
      // Predicated region
      $region9: #{tpu_custom_call.1} parent=5 // pred_check
        _
      $region10: #{tpu_custom_call.1} parent=5 // pred_check_branch
        %246 = sbr.rel (%p243) target = $region12
      $region11: #{tpu_custom_call.1} parent=5 // pred_region
        %s247 = ssub.s32 %s25, 1
        // Predicated region
        $region13: #{tpu_custom_call.1} parent=11 // pred_check
          %p248 = pneg %p86
        $region14: #{tpu_custom_call.1} parent=11 // pred_check_branch
          %250 = sbr.rel (%p248) target = $region16
        $region15: #{tpu_custom_call.1} parent=11 // pred_region
          %252 = vsyncadd [#allocation6], 0
          %s254 = sshll.u32 %s1, 4
          %s255 = int_to_ptr.hbm [resolvable:$true] %s254
          %s256 = sshll.u32 [#allocation5], 4
          %s257 = int_to_ptr.vmem [resolvable:$true] %s256
          %259 = dma.hbm_to_vmem [thread:$0]  %s255, 32, %s257, [#allocation6]
        $region16: #{tpu_custom_call.1} parent=11 // pred_fallthru
          _
        // Predicated region
        $region17: #{tpu_custom_call.1} parent=11 // pred_check
          %p260 = pneg %p107
        $region18: #{tpu_custom_call.1} parent=11 // pred_check_branch
          %262 = sbr.rel (%p260) target = $region20
        $region19: #{tpu_custom_call.1} parent=11 // pred_region
          %264 = vsyncadd [#allocation6], 0
          %s266 = sshll.u32 %s2, 4
          %s267 = int_to_ptr.hbm [resolvable:$true] %s266
          %s268 = sshll.u32 [#allocation7], 4
          %s269 = int_to_ptr.vmem [resolvable:$true] %s268
          %271 = dma.hbm_to_vmem [thread:$0]  %s267, 32, %s269, [#allocation6]
        $region20: #{tpu_custom_call.1} parent=11 // pred_fallthru
          _
        // Predicated region
        $region21: #{tpu_custom_call.1} parent=11 // pred_check
          %p272 = pneg %p128
        $region22: #{tpu_custom_call.1} parent=11 // pred_check_branch
          %274 = sbr.rel (%p272) target = $region24
        $region23: #{tpu_custom_call.1} parent=11 // pred_region
          %276 = vsyncadd [#allocation9], 0
          %s277 = sshll.u32 %s3, 4
          %s278 = int_to_ptr.hbm [resolvable:$true] %s277
          %s279 = sshll.u32 [#allocation8], 4
          %s280 = int_to_ptr.vmem [resolvable:$true] %s279
          %285 = dma.hbm_to_vmem [thread:$0]  %s278, 12288, %s280, [#allocation9], 384, 384, 24
        $region24: #{tpu_custom_call.1} parent=11 // pred_fallthru
          _
        // Predicated region
        $region25: #{tpu_custom_call.1} parent=11 // pred_check
          %p286 = pneg %p149
        $region26: #{tpu_custom_call.1} parent=11 // pred_check_branch
          %288 = sbr.rel (%p286) target = $region28
        $region27: #{tpu_custom_call.1} parent=11 // pred_region
          %290 = vsyncadd [#allocation9], 0
          %s292 = sshll.u32 %s4, 4
          %s293 = int_to_ptr.hbm [resolvable:$true] %s292
          %s294 = sshll.u32 [#allocation10], 4
          %s295 = int_to_ptr.vmem [resolvable:$true] %s294
          %297 = dma.hbm_to_vmem [thread:$0]  %s293, 96, %s295, [#allocation9]
        $region28: #{tpu_custom_call.1} parent=11 // pred_fallthru
          _
      $region12: #{tpu_custom_call.1} parent=5 // pred_fallthru
        _
      %p298 = scmp.lt.s32.totalorder %s25, 4
      // Predicated region
      $region29: #{tpu_custom_call.1} parent=5 // pred_check
        %p299 = pneg %p298
      $region30: #{tpu_custom_call.1} parent=5 // pred_check_branch
        %301 = sbr.rel (%p299) target = $region32
      $region31: #{tpu_custom_call.1} parent=5 // pred_region
        // Predicated region
        $region33: #{tpu_custom_call.1} parent=31 // pred_check
          %p302 = pneg %p59
        $region34: #{tpu_custom_call.1} parent=31 // pred_check_branch
          %304 = sbr.rel (%p302) target = $region36
        $region35: #{tpu_custom_call.1} parent=31 // pred_region
          %s305 = sand.u32 %s49, 1
          %s306 = scalar_lea.sflag [#allocation3], %s305
          %s307 = sand.u32 %s49, 1
          %s308 = smul.addr %s307, 256
          %s309 = scalar_lea.vmem [#allocation2], %s308
          %s310 = smul.u32 16, %s33
          %312 = vsyncadd %s306, 0
          %s313 = smul.addr %s310, 2
          %s314 = smul.addr %s32, 64
          %s315 = sadd.s32 %s313, %s314
          %s316 = smul.addr %s315, 8
          %s317 = scalar_lea.hbm %s0, %s316
          %s318 = sshll.u32 %s317, 4
          %s319 = int_to_ptr.hbm [resolvable:$true] %s318
          %s320 = sshll.u32 %s309, 4
          %s321 = int_to_ptr.vmem [resolvable:$true] %s320
          %326 = dma.hbm_to_vmem [thread:$0]  %s319, 4096, %s321, %s306, 256, 256, 16
        $region36: #{tpu_custom_call.1} parent=31 // pred_fallthru
          _
      $region32: #{tpu_custom_call.1} parent=5 // pred_fallthru
        _
      %p327 = scmp.le.s32.totalorder 1, %s25
      %p328 = scmp.lt.s32.totalorder %s25, 5
      %p329 = pnand %p327, %p328
      %p330 = pneg %p329
      // Predicated region
      $region37: #{tpu_custom_call.1} parent=5 // pred_check
        _
      $region38: #{tpu_custom_call.1} parent=5 // pred_check_branch
        %332 = sbr.rel (%p329) target = $region40
      $region39: #{tpu_custom_call.1} parent=5 // pred_region
        %s333 = ssub.s32 %s25, 1
        %s334 = sand.u32 %s52, 1
        %s335 = scalar_lea.sflag [#allocation3], %s334
        %s336 = sand.u32 %s52, 1
        %s337 = smul.addr %s336, 256
        %s338 = scalar_lea.vmem [#allocation2], %s337
        // Predicated region
        $region41: #{tpu_custom_call.1} parent=39 // pred_check
          %p339 = pneg %p65
        $region42: #{tpu_custom_call.1} parent=39 // pred_check_branch
          %341 = sbr.rel (%p339) target = $region44
        $region43: #{tpu_custom_call.1} parent=39 // pred_region
          %343 = dma.done %s335, 4096
        $region44: #{tpu_custom_call.1} parent=39 // pred_fallthru
          _
        // Predicated region
        $region45: #{tpu_custom_call.1} parent=39 // pred_check
          %p344 = pneg %p86
        $region46: #{tpu_custom_call.1} parent=39 // pred_check_branch
          %346 = sbr.rel (%p344) target = $region48
        $region47: #{tpu_custom_call.1} parent=39 // pred_region
          %348 = dma.done [#allocation6], 32
        $region48: #{tpu_custom_call.1} parent=39 // pred_fallthru
          _
        // Predicated region
        $region49: #{tpu_custom_call.1} parent=39 // pred_check
          %p349 = pneg %p107
        $region50: #{tpu_custom_call.1} parent=39 // pred_check_branch
          %351 = sbr.rel (%p349) target = $region52
        $region51: #{tpu_custom_call.1} parent=39 // pred_region
          %353 = dma.done [#allocation6], 32
        $region52: #{tpu_custom_call.1} parent=39 // pred_fallthru
          _
        // Predicated region
        $region53: #{tpu_custom_call.1} parent=39 // pred_check
          %p354 = pneg %p128
        $region54: #{tpu_custom_call.1} parent=39 // pred_check_branch
          %356 = sbr.rel (%p354) target = $region56
        $region55: #{tpu_custom_call.1} parent=39 // pred_region
          %358 = dma.done [#allocation9], 12288
        $region56: #{tpu_custom_call.1} parent=39 // pred_fallthru
          _
        // Predicated region
        $region57: #{tpu_custom_call.1} parent=39 // pred_check
          %p359 = pneg %p149
        $region58: #{tpu_custom_call.1} parent=39 // pred_check_branch
          %361 = sbr.rel (%p359) target = $region60
        $region59: #{tpu_custom_call.1} parent=39 // pred_region
          %363 = dma.done [#allocation9], 96
        $region60: #{tpu_custom_call.1} parent=39 // pred_fallthru
          _
        %s364 = sand.u32 %s52, 1
        %s365 = scalar_lea.sflag [#allocation3], %s364
        %s366 = sand.u32 %s52, 1
        %s367 = smul.addr %s366, 256
        %s368 = scalar_lea.vmem [#allocation2], %s367
        %p369 = pneg %p65
        %p370 = pneg %p62
        %p371 = pneg %p86
        %p372 = pneg %p83
        %p373 = pneg %p107
        %p374 = pneg %p104
        %p375 = pneg %p128
        %p376 = pneg %p125
        %p377 = pneg %p149
        %p378 = pneg %p146
        %p379 = pneg %p177
        %p380 = pneg %p174
        %s381 = sand.u32 %s164, 1
        %s382 = scalar_lea.sflag [#allocation4], %s381
        %s383 = sand.u32 %s164, 1
        %s384 = smul.addr %s383, 128
        %s385 = scalar_lea.vmem [#allocation11], %s384
        %p386 = pneg %p205
        %p387 = pneg %p202
        %s388 = sand.u32 %s30, 1
        %s389 = scalar_lea.sflag [#allocation13], %s388
        %s390 = sand.u32 %s192, 1
        %s391 = smul.addr %s390, 128
        %s392 = scalar_lea.vmem [#allocation12], %s391
        %p393 = pneg %p233
        %p394 = pneg %p230
        %s395 = sand.u32 %s30, 1
        %s396 = scalar_lea.sflag [#allocation13], %s395
        %s397 = sand.u32 %s220, 1
        %s398 = smul.addr %s397, 128
        %s399 = scalar_lea.vmem [#allocation14], %s398
        %s400 = smul.u32 16, %s35
        %s401 = smul.u32 16, %s35
        %s402 = smul.u32 16, %s35
        %s403 = smul.u32 16, %s35
        %v404 = vld [vmem:[%s338] sm:$0xff]
        %v405 = vld [vmem:[%s338 + $0x8] sm:$0xff]
        %v406 = vld [vmem:[%s338 + $0x10] sm:$0xff]
        %v407 = vld [vmem:[%s338 + $0x18] sm:$0xff]
        %v408 = vld [vmem:[%s338 + $0x20] sm:$0xff]
        %v409 = vld [vmem:[%s338 + $0x28] sm:$0xff]
        %v410 = vld [vmem:[%s338 + $0x30] sm:$0xff]
        %v411 = vld [vmem:[%s338 + $0x38] sm:$0xff]
        %v412 = vld [vmem:[%s338 + $0x40] sm:$0xff]
        %v413 = vld [vmem:[%s338 + $0x48] sm:$0xff]
        %v414 = vld [vmem:[%s338 + $0x50] sm:$0xff]
        %v415 = vld [vmem:[%s338 + $0x58] sm:$0xff]
        %v416 = vld [vmem:[%s338 + $0x60] sm:$0xff]
        %v417 = vld [vmem:[%s338 + $0x68] sm:$0xff]
        %v418 = vld [vmem:[%s338 + $0x70] sm:$0xff]
        %v419 = vld [vmem:[%s338 + $0x78] sm:$0xff]
        %v420 = vld [vmem:[%s338 + $0x80] sm:$0xff]
        %v421 = vld [vmem:[%s338 + $0x88] sm:$0xff]
        %v422 = vld [vmem:[%s338 + $0x90] sm:$0xff]
        %v423 = vld [vmem:[%s338 + $0x98] sm:$0xff]
        %v424 = vld [vmem:[%s338 + $0xa0] sm:$0xff]
        %v425 = vld [vmem:[%s338 + $0xa8] sm:$0xff]
        %v426 = vld [vmem:[%s338 + $0xb0] sm:$0xff]
        %v427 = vld [vmem:[%s338 + $0xb8] sm:$0xff]
        %v428 = vld [vmem:[%s338 + $0xc0] sm:$0xff]
        %v429 = vld [vmem:[%s338 + $0xc8] sm:$0xff]
        %v430 = vld [vmem:[%s338 + $0xd0] sm:$0xff]
        %v431 = vld [vmem:[%s338 + $0xd8] sm:$0xff]
        %v432 = vld [vmem:[%s338 + $0xe0] sm:$0xff]
        %v433 = vld [vmem:[%s338 + $0xe8] sm:$0xff]
        %v434 = vld [vmem:[%s338 + $0xf0] sm:$0xff]
        %v435 = vld [vmem:[%s338 + $0xf8] sm:$0xff]
        %v436 = vld [vmem:[#allocation5] sm:$0x3]
        %v437 = vld [vmem:[#allocation7] sm:$0x3]
        %v438 = vadd.f32 %v404, %v405
        %439 = vadd.xlane.f32.xlu0 %v438
        %v440 = vpop.xlane.xlu0 %439
        %v441 = vadd.f32 %v406, %v407
        %442 = vadd.xlane.f32.xlu0 %v441
        %v443 = vpop.xlane.xlu0 %442
        %v444 = vadd.f32 %v408, %v409
        %445 = vadd.xlane.f32.xlu0 %v444
        %v446 = vpop.xlane.xlu0 %445
        %v447 = vadd.f32 %v410, %v411
        %448 = vadd.xlane.f32.xlu0 %v447
        %v449 = vpop.xlane.xlu0 %448
        %v450 = vadd.f32 %v412, %v413
        %451 = vadd.xlane.f32.xlu0 %v450
        %v452 = vpop.xlane.xlu0 %451
        %v453 = vadd.f32 %v414, %v415
        %454 = vadd.xlane.f32.xlu0 %v453
        %v455 = vpop.xlane.xlu0 %454
        %v456 = vadd.f32 %v416, %v417
        %457 = vadd.xlane.f32.xlu0 %v456
        %v458 = vpop.xlane.xlu0 %457
        %v459 = vadd.f32 %v418, %v419
        %460 = vadd.xlane.f32.xlu0 %v459
        %v461 = vpop.xlane.xlu0 %460
        %v462 = vadd.f32 %v420, %v421
        %463 = vadd.xlane.f32.xlu0 %v462
        %v464 = vpop.xlane.xlu0 %463
        %v465 = vadd.f32 %v422, %v423
        %466 = vadd.xlane.f32.xlu0 %v465
        %v467 = vpop.xlane.xlu0 %466
        %v468 = vadd.f32 %v424, %v425
        %469 = vadd.xlane.f32.xlu0 %v468
        %v470 = vpop.xlane.xlu0 %469
        %v471 = vadd.f32 %v426, %v427
        %472 = vadd.xlane.f32.xlu0 %v471
        %v473 = vpop.xlane.xlu0 %472
        %v474 = vadd.f32 %v428, %v429
        %475 = vadd.xlane.f32.xlu0 %v474
        %v476 = vpop.xlane.xlu0 %475
        %v477 = vadd.f32 %v430, %v431
        %478 = vadd.xlane.f32.xlu0 %v477
        %v479 = vpop.xlane.xlu0 %478
        %v480 = vadd.f32 %v432, %v433
        %481 = vadd.xlane.f32.xlu0 %v480
        %v482 = vpop.xlane.xlu0 %481
        %v483 = vadd.f32 %v434, %v435
        %484 = vadd.xlane.f32.xlu0 %v483
        %v485 = vpop.xlane.xlu0 %484
        %v486 = vrcp.pop 256.0
        %v487 = vmul.f32 256.0, %v486
        %v488 = vsub.f32 1.0, %v487
        %v489 = vmul.f32 %v486, %v488
        %v490 = vadd.f32 %v486, %v489
        %vm491 = vweird.f32 %v486
        %v492 = vsel %vm491, %v486, %v490
        %v493 = vmul.f32 %v440, %v492
        %v494 = vmul.f32 %v443, %v492
        %v495 = vmul.f32 %v446, %v492
        %v496 = vmul.f32 %v449, %v492
        %v497 = vmul.f32 %v452, %v492
        %v498 = vmul.f32 %v455, %v492
        %v499 = vmul.f32 %v458, %v492
        %v500 = vmul.f32 %v461, %v492
        %v501 = vmul.f32 %v464, %v492
        %v502 = vmul.f32 %v467, %v492
        %v503 = vmul.f32 %v470, %v492
        %v504 = vmul.f32 %v473, %v492
        %v505 = vmul.f32 %v476, %v492
        %v506 = vmul.f32 %v479, %v492
        %v507 = vmul.f32 %v482, %v492
        %v508 = vmul.f32 %v485, %v492
        %v509 = vsub.f32 %v404, %v493
        %v510 = vsub.f32 %v405, %v493
        %v511 = vsub.f32 %v406, %v494
        %v512 = vsub.f32 %v407, %v494
        %v513 = vsub.f32 %v408, %v495
        %v514 = vsub.f32 %v409, %v495
        %v515 = vsub.f32 %v410, %v496
        %v516 = vsub.f32 %v411, %v496
        %v517 = vsub.f32 %v412, %v497
        %v518 = vsub.f32 %v413, %v497
        %v519 = vsub.f32 %v414, %v498
        %v520 = vsub.f32 %v415, %v498
        %v521 = vsub.f32 %v416, %v499
        %v522 = vsub.f32 %v417, %v499
        %v523 = vsub.f32 %v418, %v500
        %v524 = vsub.f32 %v419, %v500
        %v525 = vsub.f32 %v420, %v501
        %v526 = vsub.f32 %v421, %v501
        %v527 = vsub.f32 %v422, %v502
        %v528 = vsub.f32 %v423, %v502
        %v529 = vsub.f32 %v424, %v503
        %v530 = vsub.f32 %v425, %v503
        %v531 = vsub.f32 %v426, %v504
        %v532 = vsub.f32 %v427, %v504
        %v533 = vsub.f32 %v428, %v505
        %v534 = vsub.f32 %v429, %v505
        %v535 = vsub.f32 %v430, %v506
        %v536 = vsub.f32 %v431, %v506
        %v537 = vsub.f32 %v432, %v507
        %v538 = vsub.f32 %v433, %v507
        %v539 = vsub.f32 %v434, %v508
        %v540 = vsub.f32 %v435, %v508
        %v541 = vmul.f32 %v509, %v509
        %v542 = vmul.f32 %v510, %v510
        %v543 = vmul.f32 %v511, %v511
        %v544 = vmul.f32 %v512, %v512
        %v545 = vmul.f32 %v513, %v513
        %v546 = vmul.f32 %v514, %v514
        %v547 = vmul.f32 %v515, %v515
        %v548 = vmul.f32 %v516, %v516
        %v549 = vmul.f32 %v517, %v517
        %v550 = vmul.f32 %v518, %v518
        %v551 = vmul.f32 %v519, %v519
        %v552 = vmul.f32 %v520, %v520
        %v553 = vmul.f32 %v521, %v521
        %v554 = vmul.f32 %v522, %v522
        %v555 = vmul.f32 %v523, %v523
        %v556 = vmul.f32 %v524, %v524
        %v557 = vmul.f32 %v525, %v525
        %v558 = vmul.f32 %v526, %v526
        %v559 = vmul.f32 %v527, %v527
        %v560 = vmul.f32 %v528, %v528
        %v561 = vmul.f32 %v529, %v529
        %v562 = vmul.f32 %v530, %v530
        %v563 = vmul.f32 %v531, %v531
        %v564 = vmul.f32 %v532, %v532
        %v565 = vmul.f32 %v533, %v533
        %v566 = vmul.f32 %v534, %v534
        %v567 = vmul.f32 %v535, %v535
        %v568 = vmul.f32 %v536, %v536
        %v569 = vmul.f32 %v537, %v537
        %v570 = vmul.f32 %v538, %v538
        %v571 = vmul.f32 %v539, %v539
        %v572 = vmul.f32 %v540, %v540
        %v573 = vadd.f32 %v541, %v542
        %574 = vadd.xlane.f32.xlu0 %v573
        %v575 = vpop.xlane.xlu0 %574
        %v576 = vadd.f32 %v543, %v544
        %577 = vadd.xlane.f32.xlu0 %v576
        %v578 = vpop.xlane.xlu0 %577
        %v579 = vadd.f32 %v545, %v546
        %580 = vadd.xlane.f32.xlu0 %v579
        %v581 = vpop.xlane.xlu0 %580
        %v582 = vadd.f32 %v547, %v548
        %583 = vadd.xlane.f32.xlu0 %v582
        %v584 = vpop.xlane.xlu0 %583
        %v585 = vadd.f32 %v549, %v550
        %586 = vadd.xlane.f32.xlu0 %v585
        %v587 = vpop.xlane.xlu0 %586
        %v588 = vadd.f32 %v551, %v552
        %589 = vadd.xlane.f32.xlu0 %v588
        %v590 = vpop.xlane.xlu0 %589
        %v591 = vadd.f32 %v553, %v554
        %592 = vadd.xlane.f32.xlu0 %v591
        %v593 = vpop.xlane.xlu0 %592
        %v594 = vadd.f32 %v555, %v556
        %595 = vadd.xlane.f32.xlu0 %v594
        %v596 = vpop.xlane.xlu0 %595
        %v597 = vadd.f32 %v557, %v558
        %598 = vadd.xlane.f32.xlu0 %v597
        %v599 = vpop.xlane.xlu0 %598
        %v600 = vadd.f32 %v559, %v560
        %601 = vadd.xlane.f32.xlu0 %v600
        %v602 = vpop.xlane.xlu0 %601
        %v603 = vadd.f32 %v561, %v562
        %604 = vadd.xlane.f32.xlu0 %v603
        %v605 = vpop.xlane.xlu0 %604
        %v606 = vadd.f32 %v563, %v564
        %607 = vadd.xlane.f32.xlu0 %v606
        %v608 = vpop.xlane.xlu0 %607
        %v609 = vadd.f32 %v565, %v566
        %610 = vadd.xlane.f32.xlu0 %v609
        %v611 = vpop.xlane.xlu0 %610
        %v612 = vadd.f32 %v567, %v568
        %613 = vadd.xlane.f32.xlu0 %v612
        %v614 = vpop.xlane.xlu0 %613
        %v615 = vadd.f32 %v569, %v570
        %616 = vadd.xlane.f32.xlu0 %v615
        %v617 = vpop.xlane.xlu0 %616
        %v618 = vadd.f32 %v571, %v572
        %619 = vadd.xlane.f32.xlu0 %v618
        %v620 = vpop.xlane.xlu0 %619
        %v621 = vmul.f32 %v575, %v492
        %v622 = vmul.f32 %v578, %v492
        %v623 = vmul.f32 %v581, %v492
        %v624 = vmul.f32 %v584, %v492
        %v625 = vmul.f32 %v587, %v492
        %v626 = vmul.f32 %v590, %v492
        %v627 = vmul.f32 %v593, %v492
        %v628 = vmul.f32 %v596, %v492
        %v629 = vmul.f32 %v599, %v492
        %v630 = vmul.f32 %v602, %v492
        %v631 = vmul.f32 %v605, %v492
        %v632 = vmul.f32 %v608, %v492
        %v633 = vmul.f32 %v611, %v492
        %v634 = vmul.f32 %v614, %v492
        %v635 = vmul.f32 %v617, %v492
        %v636 = vmul.f32 %v620, %v492
        %v637 = vadd.f32 %v621, 1e-05
        %v638 = vadd.f32 %v622, 1e-05
        %v639 = vadd.f32 %v623, 1e-05
        %v640 = vadd.f32 %v624, 1e-05
        %v641 = vadd.f32 %v625, 1e-05
        %v642 = vadd.f32 %v626, 1e-05
        %v643 = vadd.f32 %v627, 1e-05
        %v644 = vadd.f32 %v628, 1e-05
        %v645 = vadd.f32 %v629, 1e-05
        %v646 = vadd.f32 %v630, 1e-05
        %v647 = vadd.f32 %v631, 1e-05
        %v648 = vadd.f32 %v632, 1e-05
        %v649 = vadd.f32 %v633, 1e-05
        %v650 = vadd.f32 %v634, 1e-05
        %v651 = vadd.f32 %v635, 1e-05
        %v652 = vadd.f32 %v636, 1e-05
        %v653 = vrsqrt.pop %v637
        %v654 = vmul.f32 %v653, %v637
        %v655 = vmul.f32 %v654, %v653
        %v656 = vmul.f32 0.5, %v655
        %v657 = vsub.f32 1.5, %v656
        %v658 = vmul.f32 %v653, %v657
        %vm659 = vweird.f32 %v637
        %vm660 = vweird.f32 %v653
        %vm661 = vmor %vm659, %vm660
        %v662 = vsel %vm661, %v653, %v658
        %v663 = vrsqrt.pop %v638
        %v664 = vmul.f32 %v663, %v638
        %v665 = vmul.f32 %v664, %v663
        %v666 = vmul.f32 0.5, %v665
        %v667 = vsub.f32 1.5, %v666
        %v668 = vmul.f32 %v663, %v667
        %vm669 = vweird.f32 %v638
        %vm670 = vweird.f32 %v663
        %vm671 = vmor %vm669, %vm670
        %v672 = vsel %vm671, %v663, %v668
        %v673 = vrsqrt.pop %v639
        %v674 = vmul.f32 %v673, %v639
        %v675 = vmul.f32 %v674, %v673
        %v676 = vmul.f32 0.5, %v675
        %v677 = vsub.f32 1.5, %v676
        %v678 = vmul.f32 %v673, %v677
        %vm679 = vweird.f32 %v639
        %vm680 = vweird.f32 %v673
        %vm681 = vmor %vm679, %vm680
        %v682 = vsel %vm681, %v673, %v678
        %v683 = vrsqrt.pop %v640
        %v684 = vmul.f32 %v683, %v640
        %v685 = vmul.f32 %v684, %v683
        %v686 = vmul.f32 0.5, %v685
        %v687 = vsub.f32 1.5, %v686
        %v688 = vmul.f32 %v683, %v687
        %vm689 = vweird.f32 %v640
        %vm690 = vweird.f32 %v683
        %vm691 = vmor %vm689, %vm690
        %v692 = vsel %vm691, %v683, %v688
        %v693 = vrsqrt.pop %v641
        %v694 = vmul.f32 %v693, %v641
        %v695 = vmul.f32 %v694, %v693
        %v696 = vmul.f32 0.5, %v695
        %v697 = vsub.f32 1.5, %v696
        %v698 = vmul.f32 %v693, %v697
        %vm699 = vweird.f32 %v641
        %vm700 = vweird.f32 %v693
        %vm701 = vmor %vm699, %vm700
        %v702 = vsel %vm701, %v693, %v698
        %v703 = vrsqrt.pop %v642
        %v704 = vmul.f32 %v703, %v642
        %v705 = vmul.f32 %v704, %v703
        %v706 = vmul.f32 0.5, %v705
        %v707 = vsub.f32 1.5, %v706
        %v708 = vmul.f32 %v703, %v707
        %vm709 = vweird.f32 %v642
        %vm710 = vweird.f32 %v703
        %vm711 = vmor %vm709, %vm710
        %v712 = vsel %vm711, %v703, %v708
        %v713 = vrsqrt.pop %v643
        %v714 = vmul.f32 %v713, %v643
        %v715 = vmul.f32 %v714, %v713
        %v716 = vmul.f32 0.5, %v715
        %v717 = vsub.f32 1.5, %v716
        %v718 = vmul.f32 %v713, %v717
        %vm719 = vweird.f32 %v643
        %vm720 = vweird.f32 %v713
        %vm721 = vmor %vm719, %vm720
        %v722 = vsel %vm721, %v713, %v718
        %v723 = vrsqrt.pop %v644
        %v724 = vmul.f32 %v723, %v644
        %v725 = vmul.f32 %v724, %v723
        %v726 = vmul.f32 0.5, %v725
        %v727 = vsub.f32 1.5, %v726
        %v728 = vmul.f32 %v723, %v727
        %vm729 = vweird.f32 %v644
        %vm730 = vweird.f32 %v723
        %vm731 = vmor %vm729, %vm730
        %v732 = vsel %vm731, %v723, %v728
        %v733 = vrsqrt.pop %v645
        %v734 = vmul.f32 %v733, %v645
        %v735 = vmul.f32 %v734, %v733
        %v736 = vmul.f32 0.5, %v735
        %v737 = vsub.f32 1.5, %v736
        %v738 = vmul.f32 %v733, %v737
        %vm739 = vweird.f32 %v645
        %vm740 = vweird.f32 %v733
        %vm741 = vmor %vm739, %vm740
        %v742 = vsel %vm741, %v733, %v738
        %v743 = vrsqrt.pop %v646
        %v744 = vmul.f32 %v743, %v646
        %v745 = vmul.f32 %v744, %v743
        %v746 = vmul.f32 0.5, %v745
        %v747 = vsub.f32 1.5, %v746
        %v748 = vmul.f32 %v743, %v747
        %vm749 = vweird.f32 %v646
        %vm750 = vweird.f32 %v743
        %vm751 = vmor %vm749, %vm750
        %v752 = vsel %vm751, %v743, %v748
        %v753 = vrsqrt.pop %v647
        %v754 = vmul.f32 %v753, %v647
        %v755 = vmul.f32 %v754, %v753
        %v756 = vmul.f32 0.5, %v755
        %v757 = vsub.f32 1.5, %v756
        %v758 = vmul.f32 %v753, %v757
        %vm759 = vweird.f32 %v647
        %vm760 = vweird.f32 %v753
        %vm761 = vmor %vm759, %vm760
        %v762 = vsel %vm761, %v753, %v758
        %v763 = vrsqrt.pop %v648
        %v764 = vmul.f32 %v763, %v648
        %v765 = vmul.f32 %v764, %v763
        %v766 = vmul.f32 0.5, %v765
        %v767 = vsub.f32 1.5, %v766
        %v768 = vmul.f32 %v763, %v767
        %vm769 = vweird.f32 %v648
        %vm770 = vweird.f32 %v763
        %vm771 = vmor %vm769, %vm770
        %v772 = vsel %vm771, %v763, %v768
        %v773 = vrsqrt.pop %v649
        %v774 = vmul.f32 %v773, %v649
        %v775 = vmul.f32 %v774, %v773
        %v776 = vmul.f32 0.5, %v775
        %v777 = vsub.f32 1.5, %v776
        %v778 = vmul.f32 %v773, %v777
        %vm779 = vweird.f32 %v649
        %vm780 = vweird.f32 %v773
        %vm781 = vmor %vm779, %vm780
        %v782 = vsel %vm781, %v773, %v778
        %v783 = vrsqrt.pop %v650
        %v784 = vmul.f32 %v783, %v650
        %v785 = vmul.f32 %v784, %v783
        %v786 = vmul.f32 0.5, %v785
        %v787 = vsub.f32 1.5, %v786
        %v788 = vmul.f32 %v783, %v787
        %vm789 = vweird.f32 %v650
        %vm790 = vweird.f32 %v783
        %vm791 = vmor %vm789, %vm790
        %v792 = vsel %vm791, %v783, %v788
        %v793 = vrsqrt.pop %v651
        %v794 = vmul.f32 %v793, %v651
        %v795 = vmul.f32 %v794, %v793
        %v796 = vmul.f32 0.5, %v795
        %v797 = vsub.f32 1.5, %v796
        %v798 = vmul.f32 %v793, %v797
        %vm799 = vweird.f32 %v651
        %vm800 = vweird.f32 %v793
        %vm801 = vmor %vm799, %vm800
        %v802 = vsel %vm801, %v793, %v798
        %v803 = vrsqrt.pop %v652
        %v804 = vmul.f32 %v803, %v652
        %v805 = vmul.f32 %v804, %v803
        %v806 = vmul.f32 0.5, %v805
        %v807 = vsub.f32 1.5, %v806
        %v808 = vmul.f32 %v803, %v807
        %vm809 = vweird.f32 %v652
        %vm810 = vweird.f32 %v803
        %vm811 = vmor %vm809, %vm810
        %v812 = vsel %vm811, %v803, %v808
        %v813 = vmul.f32 %v509, %v662
        %v814 = vmul.f32 %v510, %v662
        %v815 = vmul.f32 %v511, %v672
        %v816 = vmul.f32 %v512, %v672
        %v817 = vmul.f32 %v513, %v682
        %v818 = vmul.f32 %v514, %v682
        %v819 = vmul.f32 %v515, %v692
        %v820 = vmul.f32 %v516, %v692
        %v821 = vmul.f32 %v517, %v702
        %v822 = vmul.f32 %v518, %v702
        %v823 = vmul.f32 %v519, %v712
        %v824 = vmul.f32 %v520, %v712
        %v825 = vmul.f32 %v521, %v722
        %v826 = vmul.f32 %v522, %v722
        %v827 = vmul.f32 %v523, %v732
        %v828 = vmul.f32 %v524, %v732
        %v829 = vmul.f32 %v525, %v742
        %v830 = vmul.f32 %v526, %v742
        %v831 = vmul.f32 %v527, %v752
        %v832 = vmul.f32 %v528, %v752
        %v833 = vmul.f32 %v529, %v762
        %v834 = vmul.f32 %v530, %v762
        %v835 = vmul.f32 %v531, %v772
        %v836 = vmul.f32 %v532, %v772
        %v837 = vmul.f32 %v533, %v782
        %v838 = vmul.f32 %v534, %v782
        %v839 = vmul.f32 %v535, %v792
        %v840 = vmul.f32 %v536, %v792
        %v841 = vmul.f32 %v537, %v802
        %v842 = vmul.f32 %v538, %v802
        %v843 = vmul.f32 %v539, %v812
        %v844 = vmul.f32 %v540, %v812
        %v846 = vperm.slane %v436, 0
        %v847 = vperm.slane %v436, 1
        %v850 = vmul.f32 %v813, %v846
        %v851 = vmul.f32 %v814, %v847
        %v852 = vmul.f32 %v815, %v846
        %v853 = vmul.f32 %v816, %v847
        %v854 = vmul.f32 %v817, %v846
        %v855 = vmul.f32 %v818, %v847
        %v856 = vmul.f32 %v819, %v846
        %v857 = vmul.f32 %v820, %v847
        %v858 = vmul.f32 %v821, %v846
        %v859 = vmul.f32 %v822, %v847
        %v860 = vmul.f32 %v823, %v846
        %v861 = vmul.f32 %v824, %v847
        %v862 = vmul.f32 %v825, %v846
        %v863 = vmul.f32 %v826, %v847
        %v864 = vmul.f32 %v827, %v846
        %v865 = vmul.f32 %v828, %v847
        %v866 = vmul.f32 %v829, %v846
        %v867 = vmul.f32 %v830, %v847
        %v868 = vmul.f32 %v831, %v846
        %v869 = vmul.f32 %v832, %v847
        %v870 = vmul.f32 %v833, %v846
        %v871 = vmul.f32 %v834, %v847
        %v872 = vmul.f32 %v835, %v846
        %v873 = vmul.f32 %v836, %v847
        %v874 = vmul.f32 %v837, %v846
        %v875 = vmul.f32 %v838, %v847
        %v876 = vmul.f32 %v839, %v846
        %v877 = vmul.f32 %v840, %v847
        %v878 = vmul.f32 %v841, %v846
        %v879 = vmul.f32 %v842, %v847
        %v880 = vmul.f32 %v843, %v846
        %v881 = vmul.f32 %v844, %v847
        %v883 = vperm.slane %v437, 0
        %v884 = vperm.slane %v437, 1
        %v887 = vadd.f32 %v850, %v883
        %v888 = vadd.f32 %v851, %v884
        %v889 = vadd.f32 %v852, %v883
        %v890 = vadd.f32 %v853, %v884
        %v891 = vadd.f32 %v854, %v883
        %v892 = vadd.f32 %v855, %v884
        %v893 = vadd.f32 %v856, %v883
        %v894 = vadd.f32 %v857, %v884
        %v895 = vadd.f32 %v858, %v883
        %v896 = vadd.f32 %v859, %v884
        %v897 = vadd.f32 %v860, %v883
        %v898 = vadd.f32 %v861, %v884
        %v899 = vadd.f32 %v862, %v883
        %v900 = vadd.f32 %v863, %v884
        %v901 = vadd.f32 %v864, %v883
        %v902 = vadd.f32 %v865, %v884
        %v903 = vadd.f32 %v866, %v883
        %v904 = vadd.f32 %v867, %v884
        %v905 = vadd.f32 %v868, %v883
        %v906 = vadd.f32 %v869, %v884
        %v907 = vadd.f32 %v870, %v883
        %v908 = vadd.f32 %v871, %v884
        %v909 = vadd.f32 %v872, %v883
        %v910 = vadd.f32 %v873, %v884
        %v911 = vadd.f32 %v874, %v883
        %v912 = vadd.f32 %v875, %v884
        %v913 = vadd.f32 %v876, %v883
        %v914 = vadd.f32 %v877, %v884
        %v915 = vadd.f32 %v878, %v883
        %v916 = vadd.f32 %v879, %v884
        %v917 = vadd.f32 %v880, %v883
        %v918 = vadd.f32 %v881, %v884
        %v919 = vpack.c.bf16 %v889, %v887
        %v920 = vpack.c.bf16 %v890, %v888
        %v921 = vpack.c.bf16 %v893, %v891
        %v922 = vpack.c.bf16 %v894, %v892
        %v923 = vpack.c.bf16 %v897, %v895
        %v924 = vpack.c.bf16 %v898, %v896
        %v925 = vpack.c.bf16 %v901, %v899
        %v926 = vpack.c.bf16 %v902, %v900
        %v927 = vpack.c.bf16 %v905, %v903
        %v928 = vpack.c.bf16 %v906, %v904
        %v929 = vpack.c.bf16 %v909, %v907
        %v930 = vpack.c.bf16 %v910, %v908
        %v931 = vpack.c.bf16 %v913, %v911
        %v932 = vpack.c.bf16 %v914, %v912
        %v933 = vpack.c.bf16 %v917, %v915
        %v934 = vpack.c.bf16 %v918, %v916
        %v935 = vld [vmem:[#allocation8] sm:$0xff]
        %v936 = vld [vmem:[#allocation8 + $0x8] sm:$0xff]
        %v937 = vld [vmem:[#allocation8 + $0x10] sm:$0xff]
        %v938 = vld [vmem:[#allocation8 + $0x18] sm:$0xff]
        %v939 = vld [vmem:[#allocation8 + $0x20] sm:$0xff]
        %v940 = vld [vmem:[#allocation8 + $0x28] sm:$0xff]
        %v941 = vld [vmem:[#allocation8 + $0x30] sm:$0xff]
        %v942 = vld [vmem:[#allocation8 + $0x38] sm:$0xff]
        %v943 = vld [vmem:[#allocation8 + $0x40] sm:$0xff]
        %v944 = vld [vmem:[#allocation8 + $0x48] sm:$0xff]
        %v945 = vld [vmem:[#allocation8 + $0x50] sm:$0xff]
        %v946 = vld [vmem:[#allocation8 + $0x58] sm:$0xff]
        %v947 = vld [vmem:[#allocation8 + $0x60] sm:$0xff]
        %v948 = vld [vmem:[#allocation8 + $0x68] sm:$0xff]
        %v949 = vld [vmem:[#allocation8 + $0x70] sm:$0xff]
        %v950 = vld [vmem:[#allocation8 + $0x78] sm:$0xff]
        %v951 = vld [vmem:[#allocation8 + $0x80] sm:$0xff]
        %v952 = vld [vmem:[#allocation8 + $0x88] sm:$0xff]
        %v953 = vld [vmem:[#allocation8 + $0x90] sm:$0xff]
        %v954 = vld [vmem:[#allocation8 + $0x98] sm:$0xff]
        %v955 = vld [vmem:[#allocation8 + $0xa0] sm:$0xff]
        %v956 = vld [vmem:[#allocation8 + $0xa8] sm:$0xff]
        %v957 = vld [vmem:[#allocation8 + $0xb0] sm:$0xff]
        %v958 = vld [vmem:[#allocation8 + $0xb8] sm:$0xff]
        %v959 = vld [vmem:[#allocation8 + $0xc0] sm:$0xff]
        %v960 = vld [vmem:[#allocation8 + $0xc8] sm:$0xff]
        %v961 = vld [vmem:[#allocation8 + $0xd0] sm:$0xff]
        %v962 = vld [vmem:[#allocation8 + $0xd8] sm:$0xff]
        %v963 = vld [vmem:[#allocation8 + $0xe0] sm:$0xff]
        %v964 = vld [vmem:[#allocation8 + $0xe8] sm:$0xff]
        %v965 = vld [vmem:[#allocation8 + $0xf0] sm:$0xff]
        %v966 = vld [vmem:[#allocation8 + $0xf8] sm:$0xff]
        %v967 = vld [vmem:[#allocation8 + $0x100] sm:$0xff]
        %v968 = vld [vmem:[#allocation8 + $0x108] sm:$0xff]
        %v969 = vld [vmem:[#allocation8 + $0x110] sm:$0xff]
        %v970 = vld [vmem:[#allocation8 + $0x118] sm:$0xff]
        %v971 = vld [vmem:[#allocation8 + $0x120] sm:$0xff]
        %v972 = vld [vmem:[#allocation8 + $0x128] sm:$0xff]
        %v973 = vld [vmem:[#allocation8 + $0x130] sm:$0xff]
        %v974 = vld [vmem:[#allocation8 + $0x138] sm:$0xff]
        %v975 = vld [vmem:[#allocation8 + $0x140] sm:$0xff]
        %v976 = vld [vmem:[#allocation8 + $0x148] sm:$0xff]
        %v977 = vld [vmem:[#allocation8 + $0x150] sm:$0xff]
        %v978 = vld [vmem:[#allocation8 + $0x158] sm:$0xff]
        %v979 = vld [vmem:[#allocation8 + $0x160] sm:$0xff]
        %v980 = vld [vmem:[#allocation8 + $0x168] sm:$0xff]
        %v981 = vld [vmem:[#allocation8 + $0x170] sm:$0xff]
        %v982 = vld [vmem:[#allocation8 + $0x178] sm:$0xff]
        %v983 = vld [vmem:[#allocation8 + $0x180] sm:$0xff]
        %v984 = vld [vmem:[#allocation8 + $0x188] sm:$0xff]
        %v985 = vld [vmem:[#allocation8 + $0x190] sm:$0xff]
        %v986 = vld [vmem:[#allocation8 + $0x198] sm:$0xff]
        %v987 = vld [vmem:[#allocation8 + $0x1a0] sm:$0xff]
        %v988 = vld [vmem:[#allocation8 + $0x1a8] sm:$0xff]
        %v989 = vld [vmem:[#allocation8 + $0x1b0] sm:$0xff]
        %v990 = vld [vmem:[#allocation8 + $0x1b8] sm:$0xff]
        %v991 = vld [vmem:[#allocation8 + $0x1c0] sm:$0xff]
        %v992 = vld [vmem:[#allocation8 + $0x1c8] sm:$0xff]
        %v993 = vld [vmem:[#allocation8 + $0x1d0] sm:$0xff]
        %v994 = vld [vmem:[#allocation8 + $0x1d8] sm:$0xff]
        %v995 = vld [vmem:[#allocation8 + $0x1e0] sm:$0xff]
        %v996 = vld [vmem:[#allocation8 + $0x1e8] sm:$0xff]
        %v997 = vld [vmem:[#allocation8 + $0x1f0] sm:$0xff]
        %v998 = vld [vmem:[#allocation8 + $0x1f8] sm:$0xff]
        %v999 = vld [vmem:[#allocation8 + $0x200] sm:$0xff]
        %v1000 = vld [vmem:[#allocation8 + $0x208] sm:$0xff]
        %v1001 = vld [vmem:[#allocation8 + $0x210] sm:$0xff]
        %v1002 = vld [vmem:[#allocation8 + $0x218] sm:$0xff]
        %v1003 = vld [vmem:[#allocation8 + $0x220] sm:$0xff]
        %v1004 = vld [vmem:[#allocation8 + $0x228] sm:$0xff]
        %v1005 = vld [vmem:[#allocation8 + $0x230] sm:$0xff]
        %v1006 = vld [vmem:[#allocation8 + $0x238] sm:$0xff]
        %v1007 = vld [vmem:[#allocation8 + $0x240] sm:$0xff]
        %v1008 = vld [vmem:[#allocation8 + $0x248] sm:$0xff]
        %v1009 = vld [vmem:[#allocation8 + $0x250] sm:$0xff]
        %v1010 = vld [vmem:[#allocation8 + $0x258] sm:$0xff]
        %v1011 = vld [vmem:[#allocation8 + $0x260] sm:$0xff]
        %v1012 = vld [vmem:[#allocation8 + $0x268] sm:$0xff]
        %v1013 = vld [vmem:[#allocation8 + $0x270] sm:$0xff]
        %v1014 = vld [vmem:[#allocation8 + $0x278] sm:$0xff]
        %v1015 = vld [vmem:[#allocation8 + $0x280] sm:$0xff]
        %v1016 = vld [vmem:[#allocation8 + $0x288] sm:$0xff]
        %v1017 = vld [vmem:[#allocation8 + $0x290] sm:$0xff]
        %v1018 = vld [vmem:[#allocation8 + $0x298] sm:$0xff]
        %v1019 = vld [vmem:[#allocation8 + $0x2a0] sm:$0xff]
        %v1020 = vld [vmem:[#allocation8 + $0x2a8] sm:$0xff]
        %v1021 = vld [vmem:[#allocation8 + $0x2b0] sm:$0xff]
        %v1022 = vld [vmem:[#allocation8 + $0x2b8] sm:$0xff]
        %v1023 = vld [vmem:[#allocation8 + $0x2c0] sm:$0xff]
        %v1024 = vld [vmem:[#allocation8 + $0x2c8] sm:$0xff]
        %v1025 = vld [vmem:[#allocation8 + $0x2d0] sm:$0xff]
        %v1026 = vld [vmem:[#allocation8 + $0x2d8] sm:$0xff]
        %v1027 = vld [vmem:[#allocation8 + $0x2e0] sm:$0xff]
        %v1028 = vld [vmem:[#allocation8 + $0x2e8] sm:$0xff]
        %v1029 = vld [vmem:[#allocation8 + $0x2f0] sm:$0xff]
        %v1030 = vld [vmem:[#allocation8 + $0x2f8] sm:$0xff]
        %v1031 = vld [vmem:[#allocation10] sm:$0x3f]
        %v1033 = vperm.slane %v1031, 0
        %v1034 = vperm.slane %v1031, 1
        %v1035 = vperm.slane %v1031, 2
        %v1036 = vperm.slane %v1031, 3
        %v1037 = vperm.slane %v1031, 4
        %v1038 = vperm.slane %v1031, 5
        %v1141 = vunpack.c.l.b16 %v935
        %v1142 = vunpack.c.h.b16 %v935
        %v1143 = vunpack.c.l.b16 %v936
        %v1144 = vunpack.c.h.b16 %v936
        %v1145 = vunpack.c.l.b16 %v937
        %v1146 = vunpack.c.h.b16 %v937
        %v1147 = vunpack.c.l.b16 %v938
        %v1148 = vunpack.c.h.b16 %v938
        %v1149 = vunpack.c.l.b16 %v939
        %v1150 = vunpack.c.h.b16 %v939
        %v1151 = vunpack.c.l.b16 %v940
        %v1152 = vunpack.c.h.b16 %v940
        %v1153 = vunpack.c.l.b16 %v941
        %v1154 = vunpack.c.h.b16 %v941
        %v1155 = vunpack.c.l.b16 %v942
        %v1156 = vunpack.c.h.b16 %v942
        %v1157 = vunpack.c.l.b16 %v943
        %v1158 = vunpack.c.h.b16 %v943
        %v1159 = vunpack.c.l.b16 %v944
        %v1160 = vunpack.c.h.b16 %v944
        %v1161 = vunpack.c.l.b16 %v945
        %v1162 = vunpack.c.h.b16 %v945
        %v1163 = vunpack.c.l.b16 %v946
        %v1164 = vunpack.c.h.b16 %v946
        %v1165 = vunpack.c.l.b16 %v947
        %v1166 = vunpack.c.h.b16 %v947
        %v1167 = vunpack.c.l.b16 %v948
        %v1168 = vunpack.c.h.b16 %v948
        %v1169 = vunpack.c.l.b16 %v949
        %v1170 = vunpack.c.h.b16 %v949
        %v1171 = vunpack.c.l.b16 %v950
        %v1172 = vunpack.c.h.b16 %v950
        %v1173 = vunpack.c.l.b16 %v951
        %v1174 = vunpack.c.h.b16 %v951
        %v1175 = vunpack.c.l.b16 %v952
        %v1176 = vunpack.c.h.b16 %v952
        %v1177 = vunpack.c.l.b16 %v953
        %v1178 = vunpack.c.h.b16 %v953
        %v1179 = vunpack.c.l.b16 %v954
        %v1180 = vunpack.c.h.b16 %v954
        %v1181 = vunpack.c.l.b16 %v955
        %v1182 = vunpack.c.h.b16 %v955
        %v1183 = vunpack.c.l.b16 %v956
        %v1184 = vunpack.c.h.b16 %v956
        %v1185 = vunpack.c.l.b16 %v957
        %v1186 = vunpack.c.h.b16 %v957
        %v1187 = vunpack.c.l.b16 %v958
        %v1188 = vunpack.c.h.b16 %v958
        %v1189 = vunpack.c.l.b16 %v959
        %v1190 = vunpack.c.h.b16 %v959
        %v1191 = vunpack.c.l.b16 %v960
        %v1192 = vunpack.c.h.b16 %v960
        %v1193 = vunpack.c.l.b16 %v961
        %v1194 = vunpack.c.h.b16 %v961
        %v1195 = vunpack.c.l.b16 %v962
        %v1196 = vunpack.c.h.b16 %v962
        %v1197 = vunpack.c.l.b16 %v963
        %v1198 = vunpack.c.h.b16 %v963
        %v1199 = vunpack.c.l.b16 %v964
        %v1200 = vunpack.c.h.b16 %v964
        %v1201 = vunpack.c.l.b16 %v965
        %v1202 = vunpack.c.h.b16 %v965
        %v1203 = vunpack.c.l.b16 %v966
        %v1204 = vunpack.c.h.b16 %v966
        %v1205 = vunpack.c.l.b16 %v967
        %v1206 = vunpack.c.h.b16 %v967
        %v1207 = vunpack.c.l.b16 %v968
        %v1208 = vunpack.c.h.b16 %v968
        %v1209 = vunpack.c.l.b16 %v969
        %v1210 = vunpack.c.h.b16 %v969
        %v1211 = vunpack.c.l.b16 %v970
        %v1212 = vunpack.c.h.b16 %v970
        %v1213 = vunpack.c.l.b16 %v971
        %v1214 = vunpack.c.h.b16 %v971
        %v1215 = vunpack.c.l.b16 %v972
        %v1216 = vunpack.c.h.b16 %v972
        %v1217 = vunpack.c.l.b16 %v973
        %v1218 = vunpack.c.h.b16 %v973
        %v1219 = vunpack.c.l.b16 %v974
        %v1220 = vunpack.c.h.b16 %v974
        %v1221 = vunpack.c.l.b16 %v975
        %v1222 = vunpack.c.h.b16 %v975
        %v1223 = vunpack.c.l.b16 %v976
        %v1224 = vunpack.c.h.b16 %v976
        %v1225 = vunpack.c.l.b16 %v977
        %v1226 = vunpack.c.h.b16 %v977
        %v1227 = vunpack.c.l.b16 %v978
        %v1228 = vunpack.c.h.b16 %v978
        %v1229 = vunpack.c.l.b16 %v979
        %v1230 = vunpack.c.h.b16 %v979
        %v1231 = vunpack.c.l.b16 %v980
        %v1232 = vunpack.c.h.b16 %v980
        %v1233 = vunpack.c.l.b16 %v981
        %v1234 = vunpack.c.h.b16 %v981
        %v1235 = vunpack.c.l.b16 %v982
        %v1236 = vunpack.c.h.b16 %v982
        %v1237 = vunpack.c.l.b16 %v983
        %v1238 = vunpack.c.h.b16 %v983
        %v1239 = vunpack.c.l.b16 %v984
        %v1240 = vunpack.c.h.b16 %v984
        %v1241 = vunpack.c.l.b16 %v985
        %v1242 = vunpack.c.h.b16 %v985
        %v1243 = vunpack.c.l.b16 %v986
        %v1244 = vunpack.c.h.b16 %v986
        %v1245 = vunpack.c.l.b16 %v987
        %v1246 = vunpack.c.h.b16 %v987
        %v1247 = vunpack.c.l.b16 %v988
        %v1248 = vunpack.c.h.b16 %v988
        %v1249 = vunpack.c.l.b16 %v989
        %v1250 = vunpack.c.h.b16 %v989
        %v1251 = vunpack.c.l.b16 %v990
        %v1252 = vunpack.c.h.b16 %v990
        %v1253 = vunpack.c.l.b16 %v991
        %v1254 = vunpack.c.h.b16 %v991
        %v1255 = vunpack.c.l.b16 %v992
        %v1256 = vunpack.c.h.b16 %v992
        %v1257 = vunpack.c.l.b16 %v993
        %v1258 = vunpack.c.h.b16 %v993
        %v1259 = vunpack.c.l.b16 %v994
        %v1260 = vunpack.c.h.b16 %v994
        %v1261 = vunpack.c.l.b16 %v995
        %v1262 = vunpack.c.h.b16 %v995
        %v1263 = vunpack.c.l.b16 %v996
        %v1264 = vunpack.c.h.b16 %v996
        %v1265 = vunpack.c.l.b16 %v997
        %v1266 = vunpack.c.h.b16 %v997
        %v1267 = vunpack.c.l.b16 %v998
        %v1268 = vunpack.c.h.b16 %v998
        %v1269 = vunpack.c.l.b16 %v999
        %v1270 = vunpack.c.h.b16 %v999
        %v1271 = vunpack.c.l.b16 %v1000
        %v1272 = vunpack.c.h.b16 %v1000
        %v1273 = vunpack.c.l.b16 %v1001
        %v1274 = vunpack.c.h.b16 %v1001
        %v1275 = vunpack.c.l.b16 %v1002
        %v1276 = vunpack.c.h.b16 %v1002
        %v1277 = vunpack.c.l.b16 %v1003
        %v1278 = vunpack.c.h.b16 %v1003
        %v1279 = vunpack.c.l.b16 %v1004
        %v1280 = vunpack.c.h.b16 %v1004
        %v1281 = vunpack.c.l.b16 %v1005
        %v1282 = vunpack.c.h.b16 %v1005
        %v1283 = vunpack.c.l.b16 %v1006
        %v1284 = vunpack.c.h.b16 %v1006
        %v1285 = vunpack.c.l.b16 %v1007
        %v1286 = vunpack.c.h.b16 %v1007
        %v1287 = vunpack.c.l.b16 %v1008
        %v1288 = vunpack.c.h.b16 %v1008
        %v1289 = vunpack.c.l.b16 %v1009
        %v1290 = vunpack.c.h.b16 %v1009
        %v1291 = vunpack.c.l.b16 %v1010
        %v1292 = vunpack.c.h.b16 %v1010
        %v1293 = vunpack.c.l.b16 %v1011
        %v1294 = vunpack.c.h.b16 %v1011
        %v1295 = vunpack.c.l.b16 %v1012
        %v1296 = vunpack.c.h.b16 %v1012
        %v1297 = vunpack.c.l.b16 %v1013
        %v1298 = vunpack.c.h.b16 %v1013
        %v1299 = vunpack.c.l.b16 %v1014
        %v1300 = vunpack.c.h.b16 %v1014
        %v1301 = vunpack.c.l.b16 %v1015
        %v1302 = vunpack.c.h.b16 %v1015
        %v1303 = vunpack.c.l.b16 %v1016
        %v1304 = vunpack.c.h.b16 %v1016
        %v1305 = vunpack.c.l.b16 %v1017
        %v1306 = vunpack.c.h.b16 %v1017
        %v1307 = vunpack.c.l.b16 %v1018
        %v1308 = vunpack.c.h.b16 %v1018
        %v1309 = vunpack.c.l.b16 %v1019
        %v1310 = vunpack.c.h.b16 %v1019
        %v1311 = vunpack.c.l.b16 %v1020
        %v1312 = vunpack.c.h.b16 %v1020
        %v1313 = vunpack.c.l.b16 %v1021
        %v1314 = vunpack.c.h.b16 %v1021
        %v1315 = vunpack.c.l.b16 %v1022
        %v1316 = vunpack.c.h.b16 %v1022
        %v1317 = vunpack.c.l.b16 %v1023
        %v1318 = vunpack.c.h.b16 %v1023
        %v1319 = vunpack.c.l.b16 %v1024
        %v1320 = vunpack.c.h.b16 %v1024
        %v1321 = vunpack.c.l.b16 %v1025
        %v1322 = vunpack.c.h.b16 %v1025
        %v1323 = vunpack.c.l.b16 %v1026
        %v1324 = vunpack.c.h.b16 %v1026
        %v1325 = vunpack.c.l.b16 %v1027
        %v1326 = vunpack.c.h.b16 %v1027
        %v1327 = vunpack.c.l.b16 %v1028
        %v1328 = vunpack.c.h.b16 %v1028
        %v1329 = vunpack.c.l.b16 %v1029
        %v1330 = vunpack.c.h.b16 %v1029
        %v1331 = vunpack.c.l.b16 %v1030
        %v1332 = vunpack.c.h.b16 %v1030
        %v1333 = vpack.c.b16 %v1147, %v1141
        %v1334 = vpack.c.b16 %v1148, %v1142
        %v1335 = vpack.c.b16 %v1149, %v1143
        %v1336 = vpack.c.b16 %v1150, %v1144
        %v1337 = vpack.c.b16 %v1151, %v1145
        %v1338 = vpack.c.b16 %v1152, %v1146
        %v1339 = vpack.c.b16 %v1159, %v1153
        %v1340 = vpack.c.b16 %v1160, %v1154
        %v1341 = vpack.c.b16 %v1161, %v1155
        %v1342 = vpack.c.b16 %v1162, %v1156
        %v1343 = vpack.c.b16 %v1163, %v1157
        %v1344 = vpack.c.b16 %v1164, %v1158
        %v1345 = vpack.c.b16 %v1171, %v1165
        %v1346 = vpack.c.b16 %v1172, %v1166
        %v1347 = vpack.c.b16 %v1173, %v1167
        %v1348 = vpack.c.b16 %v1174, %v1168
        %v1349 = vpack.c.b16 %v1175, %v1169
        %v1350 = vpack.c.b16 %v1176, %v1170
        %v1351 = vpack.c.b16 %v1183, %v1177
        %v1352 = vpack.c.b16 %v1184, %v1178
        %v1353 = vpack.c.b16 %v1185, %v1179
        %v1354 = vpack.c.b16 %v1186, %v1180
        %v1355 = vpack.c.b16 %v1187, %v1181
        %v1356 = vpack.c.b16 %v1188, %v1182
        %v1357 = vpack.c.b16 %v1195, %v1189
        %v1358 = vpack.c.b16 %v1196, %v1190
        %v1359 = vpack.c.b16 %v1197, %v1191
        %v1360 = vpack.c.b16 %v1198, %v1192
        %v1361 = vpack.c.b16 %v1199, %v1193
        %v1362 = vpack.c.b16 %v1200, %v1194
        %v1363 = vpack.c.b16 %v1207, %v1201
        %v1364 = vpack.c.b16 %v1208, %v1202
        %v1365 = vpack.c.b16 %v1209, %v1203
        %v1366 = vpack.c.b16 %v1210, %v1204
        %v1367 = vpack.c.b16 %v1211, %v1205
        %v1368 = vpack.c.b16 %v1212, %v1206
        %v1369 = vpack.c.b16 %v1219, %v1213
        %v1370 = vpack.c.b16 %v1220, %v1214
        %v1371 = vpack.c.b16 %v1221, %v1215
        %v1372 = vpack.c.b16 %v1222, %v1216
        %v1373 = vpack.c.b16 %v1223, %v1217
        %v1374 = vpack.c.b16 %v1224, %v1218
        %v1375 = vpack.c.b16 %v1231, %v1225
        %v1376 = vpack.c.b16 %v1232, %v1226
        %v1377 = vpack.c.b16 %v1233, %v1227
        %v1378 = vpack.c.b16 %v1234, %v1228
        %v1379 = vpack.c.b16 %v1235, %v1229
        %v1380 = vpack.c.b16 %v1236, %v1230
        %v1381 = vpack.c.b16 %v1243, %v1237
        %v1382 = vpack.c.b16 %v1244, %v1238
        %v1383 = vpack.c.b16 %v1245, %v1239
        %v1384 = vpack.c.b16 %v1246, %v1240
        %v1385 = vpack.c.b16 %v1247, %v1241
        %v1386 = vpack.c.b16 %v1248, %v1242
        %v1387 = vpack.c.b16 %v1255, %v1249
        %v1388 = vpack.c.b16 %v1256, %v1250
        %v1389 = vpack.c.b16 %v1257, %v1251
        %v1390 = vpack.c.b16 %v1258, %v1252
        %v1391 = vpack.c.b16 %v1259, %v1253
        %v1392 = vpack.c.b16 %v1260, %v1254
        %v1393 = vpack.c.b16 %v1267, %v1261
        %v1394 = vpack.c.b16 %v1268, %v1262
        %v1395 = vpack.c.b16 %v1269, %v1263
        %v1396 = vpack.c.b16 %v1270, %v1264
        %v1397 = vpack.c.b16 %v1271, %v1265
        %v1398 = vpack.c.b16 %v1272, %v1266
        %v1399 = vpack.c.b16 %v1279, %v1273
        %v1400 = vpack.c.b16 %v1280, %v1274
        %v1401 = vpack.c.b16 %v1281, %v1275
        %v1402 = vpack.c.b16 %v1282, %v1276
        %v1403 = vpack.c.b16 %v1283, %v1277
        %v1404 = vpack.c.b16 %v1284, %v1278
        %v1405 = vpack.c.b16 %v1291, %v1285
        %v1406 = vpack.c.b16 %v1292, %v1286
        %v1407 = vpack.c.b16 %v1293, %v1287
        %v1408 = vpack.c.b16 %v1294, %v1288
        %v1409 = vpack.c.b16 %v1295, %v1289
        %v1410 = vpack.c.b16 %v1296, %v1290
        %v1411 = vpack.c.b16 %v1303, %v1297
        %v1412 = vpack.c.b16 %v1304, %v1298
        %v1413 = vpack.c.b16 %v1305, %v1299
        %v1414 = vpack.c.b16 %v1306, %v1300
        %v1415 = vpack.c.b16 %v1307, %v1301
        %v1416 = vpack.c.b16 %v1308, %v1302
        %v1417 = vpack.c.b16 %v1315, %v1309
        %v1418 = vpack.c.b16 %v1316, %v1310
        %v1419 = vpack.c.b16 %v1317, %v1311
        %v1420 = vpack.c.b16 %v1318, %v1312
        %v1421 = vpack.c.b16 %v1319, %v1313
        %v1422 = vpack.c.b16 %v1320, %v1314
        %v1423 = vpack.c.b16 %v1327, %v1321
        %v1424 = vpack.c.b16 %v1328, %v1322
        %v1425 = vpack.c.b16 %v1329, %v1323
        %v1426 = vpack.c.b16 %v1330, %v1324
        %v1427 = vpack.c.b16 %v1331, %v1325
        %v1428 = vpack.c.b16 %v1332, %v1326
        %1525 = vmatpush.bf16.msra.mxu0 %v1375
        %1526 = vmatpush.bf16.msra.mxu0 %v1369
        %1527 = vmatpush.bf16.msra.mxu0 %v1363
        %1528 = vmatpush.bf16.msra.mxu0 %v1357
        %1529 = vmatpush.bf16.msra.mxu0 %v1351
        %1530 = vmatpush.bf16.msra.mxu0 %v1345
        %1531 = vmatpush.bf16.msra.mxu0 %v1339
        %1532 = vmatpush.bf16.msra.mxu0 %v1333
        %1533 = vmatmul.bf16.gmra.mxu0 %v919
        %v1534 = vpop.f32.mrf.mxu0
        %v1535 = vadd.f32 %v1033, %v1534
        %v1536 = vpop.f32.mrf.mxu0
        %v1537 = vadd.f32 %v1033, %v1536
        %1538 = vmatmul.bf16.gmra.mxu0 %v921
        %v1539 = vpop.f32.mrf.mxu0
        %v1540 = vadd.f32 %v1033, %v1539
        %v1541 = vpop.f32.mrf.mxu0
        %v1542 = vadd.f32 %v1033, %v1541
        %1543 = vmatmul.bf16.gmra.mxu0 %v923
        %v1544 = vpop.f32.mrf.mxu0
        %v1545 = vadd.f32 %v1033, %v1544
        %v1546 = vpop.f32.mrf.mxu0
        %v1547 = vadd.f32 %v1033, %v1546
        %1548 = vmatmul.bf16.gmra.mxu0 %v925
        %v1549 = vpop.f32.mrf.mxu0
        %v1550 = vadd.f32 %v1033, %v1549
        %v1551 = vpop.f32.mrf.mxu0
        %v1552 = vadd.f32 %v1033, %v1551
        %1553 = vmatmul.bf16.gmra.mxu0 %v927
        %v1554 = vpop.f32.mrf.mxu0
        %v1555 = vadd.f32 %v1033, %v1554
        %v1556 = vpop.f32.mrf.mxu0
        %v1557 = vadd.f32 %v1033, %v1556
        %1558 = vmatmul.bf16.gmra.mxu0 %v929
        %v1559 = vpop.f32.mrf.mxu0
        %v1560 = vadd.f32 %v1033, %v1559
        %v1561 = vpop.f32.mrf.mxu0
        %v1562 = vadd.f32 %v1033, %v1561
        %1563 = vmatmul.bf16.gmra.mxu0 %v931
        %v1564 = vpop.f32.mrf.mxu0
        %v1565 = vadd.f32 %v1033, %v1564
        %v1566 = vpop.f32.mrf.mxu0
        %v1567 = vadd.f32 %v1033, %v1566
        %1568 = vmatmul.bf16.gmra.mxu0 %v933
        %v1569 = vpop.f32.mrf.mxu0
        %v1570 = vadd.f32 %v1033, %v1569
        %v1571 = vpop.f32.mrf.mxu0
        %v1572 = vadd.f32 %v1033, %v1571
        %1573 = vdwg.mxu0
        %1574 = vmatpush.bf16.msra.mxu0 %v1423
        %1575 = vmatpush.bf16.msra.mxu0 %v1417
        %1576 = vmatpush.bf16.msra.mxu0 %v1411
        %1577 = vmatpush.bf16.msra.mxu0 %v1405
        %1578 = vmatpush.bf16.msra.mxu0 %v1399
        %1579 = vmatpush.bf16.msra.mxu0 %v1393
        %1580 = vmatpush.bf16.msra.mxu0 %v1387
        %1581 = vmatpush.bf16.msra.mxu0 %v1381
        %1582 = vmatmul.bf16.gmra.mxu0 %v920
        %v1583 = vpop.f32.mrf.mxu0
        %v1584 = vadd.f32 %v1535, %v1583
        %v1585 = vpop.f32.mrf.mxu0
        %v1586 = vadd.f32 %v1537, %v1585
        %1587 = vmatmul.bf16.gmra.mxu0 %v922
        %v1588 = vpop.f32.mrf.mxu0
        %v1589 = vadd.f32 %v1540, %v1588
        %v1590 = vpop.f32.mrf.mxu0
        %v1591 = vadd.f32 %v1542, %v1590
        %1592 = vmatmul.bf16.gmra.mxu0 %v924
        %v1593 = vpop.f32.mrf.mxu0
        %v1594 = vadd.f32 %v1545, %v1593
        %v1595 = vpop.f32.mrf.mxu0
        %v1596 = vadd.f32 %v1547, %v1595
        %1597 = vmatmul.bf16.gmra.mxu0 %v926
        %v1598 = vpop.f32.mrf.mxu0
        %v1599 = vadd.f32 %v1550, %v1598
        %v1600 = vpop.f32.mrf.mxu0
        %v1601 = vadd.f32 %v1552, %v1600
        %1602 = vmatmul.bf16.gmra.mxu0 %v928
        %v1603 = vpop.f32.mrf.mxu0
        %v1604 = vadd.f32 %v1555, %v1603
        %v1605 = vpop.f32.mrf.mxu0
        %v1606 = vadd.f32 %v1557, %v1605
        %1607 = vmatmul.bf16.gmra.mxu0 %v930
        %v1608 = vpop.f32.mrf.mxu0
        %v1609 = vadd.f32 %v1560, %v1608
        %v1610 = vpop.f32.mrf.mxu0
        %v1611 = vadd.f32 %v1562, %v1610
        %1612 = vmatmul.bf16.gmra.mxu0 %v932
        %v1613 = vpop.f32.mrf.mxu0
        %v1614 = vadd.f32 %v1565, %v1613
        %v1615 = vpop.f32.mrf.mxu0
        %v1616 = vadd.f32 %v1567, %v1615
        %1617 = vmatmul.bf16.gmra.mxu0 %v934
        %v1618 = vpop.f32.mrf.mxu0
        %v1619 = vadd.f32 %v1570, %v1618
        %v1620 = vpop.f32.mrf.mxu0
        %v1621 = vadd.f32 %v1572, %v1620
        %1622 = vdwg.mxu0
        %1623 = vmatpush.bf16.msra.mxu0 %v1376
        %1624 = vmatpush.bf16.msra.mxu0 %v1370
        %1625 = vmatpush.bf16.msra.mxu0 %v1364
        %1626 = vmatpush.bf16.msra.mxu0 %v1358
        %1627 = vmatpush.bf16.msra.mxu0 %v1352
        %1628 = vmatpush.bf16.msra.mxu0 %v1346
        %1629 = vmatpush.bf16.msra.mxu0 %v1340
        %1630 = vmatpush.bf16.msra.mxu0 %v1334
        %1631 = vmatmul.bf16.gmra.mxu0 %v919
        %v1632 = vpop.f32.mrf.mxu0
        %v1633 = vadd.f32 %v1034, %v1632
        %v1634 = vpop.f32.mrf.mxu0
        %v1635 = vadd.f32 %v1034, %v1634
        %1636 = vmatmul.bf16.gmra.mxu0 %v921
        %v1637 = vpop.f32.mrf.mxu0
        %v1638 = vadd.f32 %v1034, %v1637
        %v1639 = vpop.f32.mrf.mxu0
        %v1640 = vadd.f32 %v1034, %v1639
        %1641 = vmatmul.bf16.gmra.mxu0 %v923
        %v1642 = vpop.f32.mrf.mxu0
        %v1643 = vadd.f32 %v1034, %v1642
        %v1644 = vpop.f32.mrf.mxu0
        %v1645 = vadd.f32 %v1034, %v1644
        %1646 = vmatmul.bf16.gmra.mxu0 %v925
        %v1647 = vpop.f32.mrf.mxu0
        %v1648 = vadd.f32 %v1034, %v1647
        %v1649 = vpop.f32.mrf.mxu0
        %v1650 = vadd.f32 %v1034, %v1649
        %1651 = vmatmul.bf16.gmra.mxu0 %v927
        %v1652 = vpop.f32.mrf.mxu0
        %v1653 = vadd.f32 %v1034, %v1652
        %v1654 = vpop.f32.mrf.mxu0
        %v1655 = vadd.f32 %v1034, %v1654
        %1656 = vmatmul.bf16.gmra.mxu0 %v929
        %v1657 = vpop.f32.mrf.mxu0
        %v1658 = vadd.f32 %v1034, %v1657
        %v1659 = vpop.f32.mrf.mxu0
        %v1660 = vadd.f32 %v1034, %v1659
        %1661 = vmatmul.bf16.gmra.mxu0 %v931
        %v1662 = vpop.f32.mrf.mxu0
        %v1663 = vadd.f32 %v1034, %v1662
        %v1664 = vpop.f32.mrf.mxu0
        %v1665 = vadd.f32 %v1034, %v1664
        %1666 = vmatmul.bf16.gmra.mxu0 %v933
        %v1667 = vpop.f32.mrf.mxu0
        %v1668 = vadd.f32 %v1034, %v1667
        %v1669 = vpop.f32.mrf.mxu0
        %v1670 = vadd.f32 %v1034, %v1669
        %1671 = vdwg.mxu0
        %1672 = vmatpush.bf16.msra.mxu0 %v1424
        %1673 = vmatpush.bf16.msra.mxu0 %v1418
        %1674 = vmatpush.bf16.msra.mxu0 %v1412
        %1675 = vmatpush.bf16.msra.mxu0 %v1406
        %1676 = vmatpush.bf16.msra.mxu0 %v1400
        %1677 = vmatpush.bf16.msra.mxu0 %v1394
        %1678 = vmatpush.bf16.msra.mxu0 %v1388
        %1679 = vmatpush.bf16.msra.mxu0 %v1382
        %1680 = vmatmul.bf16.gmra.mxu0 %v920
        %v1681 = vpop.f32.mrf.mxu0
        %v1682 = vadd.f32 %v1633, %v1681
        %v1683 = vpop.f32.mrf.mxu0
        %v1684 = vadd.f32 %v1635, %v1683
        %1685 = vmatmul.bf16.gmra.mxu0 %v922
        %v1686 = vpop.f32.mrf.mxu0
        %v1687 = vadd.f32 %v1638, %v1686
        %v1688 = vpop.f32.mrf.mxu0
        %v1689 = vadd.f32 %v1640, %v1688
        %1690 = vmatmul.bf16.gmra.mxu0 %v924
        %v1691 = vpop.f32.mrf.mxu0
        %v1692 = vadd.f32 %v1643, %v1691
        %v1693 = vpop.f32.mrf.mxu0
        %v1694 = vadd.f32 %v1645, %v1693
        %1695 = vmatmul.bf16.gmra.mxu0 %v926
        %v1696 = vpop.f32.mrf.mxu0
        %v1697 = vadd.f32 %v1648, %v1696
        %v1698 = vpop.f32.mrf.mxu0
        %v1699 = vadd.f32 %v1650, %v1698
        %1700 = vmatmul.bf16.gmra.mxu0 %v928
        %v1701 = vpop.f32.mrf.mxu0
        %v1702 = vadd.f32 %v1653, %v1701
        %v1703 = vpop.f32.mrf.mxu0
        %v1704 = vadd.f32 %v1655, %v1703
        %1705 = vmatmul.bf16.gmra.mxu0 %v930
        %v1706 = vpop.f32.mrf.mxu0
        %v1707 = vadd.f32 %v1658, %v1706
        %v1708 = vpop.f32.mrf.mxu0
        %v1709 = vadd.f32 %v1660, %v1708
        %1710 = vmatmul.bf16.gmra.mxu0 %v932
        %v1711 = vpop.f32.mrf.mxu0
        %v1712 = vadd.f32 %v1663, %v1711
        %v1713 = vpop.f32.mrf.mxu0
        %v1714 = vadd.f32 %v1665, %v1713
        %1715 = vmatmul.bf16.gmra.mxu0 %v934
        %v1716 = vpop.f32.mrf.mxu0
        %v1717 = vadd.f32 %v1668, %v1716
        %v1718 = vpop.f32.mrf.mxu0
        %v1719 = vadd.f32 %v1670, %v1718
        %1720 = vdwg.mxu0
        %1721 = vmatpush.bf16.msra.mxu0 %v1377
        %1722 = vmatpush.bf16.msra.mxu0 %v1371
        %1723 = vmatpush.bf16.msra.mxu0 %v1365
        %1724 = vmatpush.bf16.msra.mxu0 %v1359
        %1725 = vmatpush.bf16.msra.mxu0 %v1353
        %1726 = vmatpush.bf16.msra.mxu0 %v1347
        %1727 = vmatpush.bf16.msra.mxu0 %v1341
        %1728 = vmatpush.bf16.msra.mxu0 %v1335
        %1729 = vmatmul.bf16.gmra.mxu0 %v919
        %v1730 = vpop.f32.mrf.mxu0
        %v1731 = vadd.f32 %v1035, %v1730
        %v1732 = vpop.f32.mrf.mxu0
        %v1733 = vadd.f32 %v1035, %v1732
        %1734 = vmatmul.bf16.gmra.mxu0 %v921
        %v1735 = vpop.f32.mrf.mxu0
        %v1736 = vadd.f32 %v1035, %v1735
        %v1737 = vpop.f32.mrf.mxu0
        %v1738 = vadd.f32 %v1035, %v1737
        %1739 = vmatmul.bf16.gmra.mxu0 %v923
        %v1740 = vpop.f32.mrf.mxu0
        %v1741 = vadd.f32 %v1035, %v1740
        %v1742 = vpop.f32.mrf.mxu0
        %v1743 = vadd.f32 %v1035, %v1742
        %1744 = vmatmul.bf16.gmra.mxu0 %v925
        %v1745 = vpop.f32.mrf.mxu0
        %v1746 = vadd.f32 %v1035, %v1745
        %v1747 = vpop.f32.mrf.mxu0
        %v1748 = vadd.f32 %v1035, %v1747
        %1749 = vmatmul.bf16.gmra.mxu0 %v927
        %v1750 = vpop.f32.mrf.mxu0
        %v1751 = vadd.f32 %v1035, %v1750
        %v1752 = vpop.f32.mrf.mxu0
        %v1753 = vadd.f32 %v1035, %v1752
        %1754 = vmatmul.bf16.gmra.mxu0 %v929
        %v1755 = vpop.f32.mrf.mxu0
        %v1756 = vadd.f32 %v1035, %v1755
        %v1757 = vpop.f32.mrf.mxu0
        %v1758 = vadd.f32 %v1035, %v1757
        %1759 = vmatmul.bf16.gmra.mxu0 %v931
        %v1760 = vpop.f32.mrf.mxu0
        %v1761 = vadd.f32 %v1035, %v1760
        %v1762 = vpop.f32.mrf.mxu0
        %v1763 = vadd.f32 %v1035, %v1762
        %1764 = vmatmul.bf16.gmra.mxu0 %v933
        %v1765 = vpop.f32.mrf.mxu0
        %v1766 = vadd.f32 %v1035, %v1765
        %v1767 = vpop.f32.mrf.mxu0
        %v1768 = vadd.f32 %v1035, %v1767
        %1769 = vdwg.mxu0
        %1770 = vmatpush.bf16.msra.mxu0 %v1425
        %1771 = vmatpush.bf16.msra.mxu0 %v1419
        %1772 = vmatpush.bf16.msra.mxu0 %v1413
        %1773 = vmatpush.bf16.msra.mxu0 %v1407
        %1774 = vmatpush.bf16.msra.mxu0 %v1401
        %1775 = vmatpush.bf16.msra.mxu0 %v1395
        %1776 = vmatpush.bf16.msra.mxu0 %v1389
        %1777 = vmatpush.bf16.msra.mxu0 %v1383
        %1778 = vmatmul.bf16.gmra.mxu0 %v920
        %v1779 = vpop.f32.mrf.mxu0
        %v1780 = vadd.f32 %v1731, %v1779
        %v1781 = vpop.f32.mrf.mxu0
        %v1782 = vadd.f32 %v1733, %v1781
        %1783 = vmatmul.bf16.gmra.mxu0 %v922
        %v1784 = vpop.f32.mrf.mxu0
        %v1785 = vadd.f32 %v1736, %v1784
        %v1786 = vpop.f32.mrf.mxu0
        %v1787 = vadd.f32 %v1738, %v1786
        %1788 = vmatmul.bf16.gmra.mxu0 %v924
        %v1789 = vpop.f32.mrf.mxu0
        %v1790 = vadd.f32 %v1741, %v1789
        %v1791 = vpop.f32.mrf.mxu0
        %v1792 = vadd.f32 %v1743, %v1791
        %1793 = vmatmul.bf16.gmra.mxu0 %v926
        %v1794 = vpop.f32.mrf.mxu0
        %v1795 = vadd.f32 %v1746, %v1794
        %v1796 = vpop.f32.mrf.mxu0
        %v1797 = vadd.f32 %v1748, %v1796
        %1798 = vmatmul.bf16.gmra.mxu0 %v928
        %v1799 = vpop.f32.mrf.mxu0
        %v1800 = vadd.f32 %v1751, %v1799
        %v1801 = vpop.f32.mrf.mxu0
        %v1802 = vadd.f32 %v1753, %v1801
        %1803 = vmatmul.bf16.gmra.mxu0 %v930
        %v1804 = vpop.f32.mrf.mxu0
        %v1805 = vadd.f32 %v1756, %v1804
        %v1806 = vpop.f32.mrf.mxu0
        %v1807 = vadd.f32 %v1758, %v1806
        %1808 = vmatmul.bf16.gmra.mxu0 %v932
        %v1809 = vpop.f32.mrf.mxu0
        %v1810 = vadd.f32 %v1761, %v1809
        %v1811 = vpop.f32.mrf.mxu0
        %v1812 = vadd.f32 %v1763, %v1811
        %1813 = vmatmul.bf16.gmra.mxu0 %v934
        %v1814 = vpop.f32.mrf.mxu0
        %v1815 = vadd.f32 %v1766, %v1814
        %v1816 = vpop.f32.mrf.mxu0
        %v1817 = vadd.f32 %v1768, %v1816
        %1818 = vdwg.mxu0
        %1819 = vmatpush.bf16.msra.mxu0 %v1378
        %1820 = vmatpush.bf16.msra.mxu0 %v1372
        %1821 = vmatpush.bf16.msra.mxu0 %v1366
        %1822 = vmatpush.bf16.msra.mxu0 %v1360
        %1823 = vmatpush.bf16.msra.mxu0 %v1354
        %1824 = vmatpush.bf16.msra.mxu0 %v1348
        %1825 = vmatpush.bf16.msra.mxu0 %v1342
        %1826 = vmatpush.bf16.msra.mxu0 %v1336
        %1827 = vmatmul.bf16.gmra.mxu0 %v919
        %v1828 = vpop.f32.mrf.mxu0
        %v1829 = vadd.f32 %v1036, %v1828
        %v1830 = vpop.f32.mrf.mxu0
        %v1831 = vadd.f32 %v1036, %v1830
        %1832 = vmatmul.bf16.gmra.mxu0 %v921
        %v1833 = vpop.f32.mrf.mxu0
        %v1834 = vadd.f32 %v1036, %v1833
        %v1835 = vpop.f32.mrf.mxu0
        %v1836 = vadd.f32 %v1036, %v1835
        %1837 = vmatmul.bf16.gmra.mxu0 %v923
        %v1838 = vpop.f32.mrf.mxu0
        %v1839 = vadd.f32 %v1036, %v1838
        %v1840 = vpop.f32.mrf.mxu0
        %v1841 = vadd.f32 %v1036, %v1840
        %1842 = vmatmul.bf16.gmra.mxu0 %v925
        %v1843 = vpop.f32.mrf.mxu0
        %v1844 = vadd.f32 %v1036, %v1843
        %v1845 = vpop.f32.mrf.mxu0
        %v1846 = vadd.f32 %v1036, %v1845
        %1847 = vmatmul.bf16.gmra.mxu0 %v927
        %v1848 = vpop.f32.mrf.mxu0
        %v1849 = vadd.f32 %v1036, %v1848
        %v1850 = vpop.f32.mrf.mxu0
        %v1851 = vadd.f32 %v1036, %v1850
        %1852 = vmatmul.bf16.gmra.mxu0 %v929
        %v1853 = vpop.f32.mrf.mxu0
        %v1854 = vadd.f32 %v1036, %v1853
        %v1855 = vpop.f32.mrf.mxu0
        %v1856 = vadd.f32 %v1036, %v1855
        %1857 = vmatmul.bf16.gmra.mxu0 %v931
        %v1858 = vpop.f32.mrf.mxu0
        %v1859 = vadd.f32 %v1036, %v1858
        %v1860 = vpop.f32.mrf.mxu0
        %v1861 = vadd.f32 %v1036, %v1860
        %1862 = vmatmul.bf16.gmra.mxu0 %v933
        %v1863 = vpop.f32.mrf.mxu0
        %v1864 = vadd.f32 %v1036, %v1863
        %v1865 = vpop.f32.mrf.mxu0
        %v1866 = vadd.f32 %v1036, %v1865
        %1867 = vdwg.mxu0
        %1868 = vmatpush.bf16.msra.mxu0 %v1426
        %1869 = vmatpush.bf16.msra.mxu0 %v1420
        %1870 = vmatpush.bf16.msra.mxu0 %v1414
        %1871 = vmatpush.bf16.msra.mxu0 %v1408
        %1872 = vmatpush.bf16.msra.mxu0 %v1402
        %1873 = vmatpush.bf16.msra.mxu0 %v1396
        %1874 = vmatpush.bf16.msra.mxu0 %v1390
        %1875 = vmatpush.bf16.msra.mxu0 %v1384
        %1876 = vmatmul.bf16.gmra.mxu0 %v920
        %v1877 = vpop.f32.mrf.mxu0
        %v1878 = vadd.f32 %v1829, %v1877
        %v1879 = vpop.f32.mrf.mxu0
        %v1880 = vadd.f32 %v1831, %v1879
        %1881 = vmatmul.bf16.gmra.mxu0 %v922
        %v1882 = vpop.f32.mrf.mxu0
        %v1883 = vadd.f32 %v1834, %v1882
        %v1884 = vpop.f32.mrf.mxu0
        %v1885 = vadd.f32 %v1836, %v1884
        %1886 = vmatmul.bf16.gmra.mxu0 %v924
        %v1887 = vpop.f32.mrf.mxu0
        %v1888 = vadd.f32 %v1839, %v1887
        %v1889 = vpop.f32.mrf.mxu0
        %v1890 = vadd.f32 %v1841, %v1889
        %1891 = vmatmul.bf16.gmra.mxu0 %v926
        %v1892 = vpop.f32.mrf.mxu0
        %v1893 = vadd.f32 %v1844, %v1892
        %v1894 = vpop.f32.mrf.mxu0
        %v1895 = vadd.f32 %v1846, %v1894
        %1896 = vmatmul.bf16.gmra.mxu0 %v928
        %v1897 = vpop.f32.mrf.mxu0
        %v1898 = vadd.f32 %v1849, %v1897
        %v1899 = vpop.f32.mrf.mxu0
        %v1900 = vadd.f32 %v1851, %v1899
        %1901 = vmatmul.bf16.gmra.mxu0 %v930
        %v1902 = vpop.f32.mrf.mxu0
        %v1903 = vadd.f32 %v1854, %v1902
        %v1904 = vpop.f32.mrf.mxu0
        %v1905 = vadd.f32 %v1856, %v1904
        %1906 = vmatmul.bf16.gmra.mxu0 %v932
        %v1907 = vpop.f32.mrf.mxu0
        %v1908 = vadd.f32 %v1859, %v1907
        %v1909 = vpop.f32.mrf.mxu0
        %v1910 = vadd.f32 %v1861, %v1909
        %1911 = vmatmul.bf16.gmra.mxu0 %v934
        %v1912 = vpop.f32.mrf.mxu0
        %v1913 = vadd.f32 %v1864, %v1912
        %v1914 = vpop.f32.mrf.mxu0
        %v1915 = vadd.f32 %v1866, %v1914
        %1916 = vdwg.mxu0
        %1917 = vmatpush.bf16.msra.mxu0 %v1379
        %1918 = vmatpush.bf16.msra.mxu0 %v1373
        %1919 = vmatpush.bf16.msra.mxu0 %v1367
        %1920 = vmatpush.bf16.msra.mxu0 %v1361
        %1921 = vmatpush.bf16.msra.mxu0 %v1355
        %1922 = vmatpush.bf16.msra.mxu0 %v1349
        %1923 = vmatpush.bf16.msra.mxu0 %v1343
        %1924 = vmatpush.bf16.msra.mxu0 %v1337
        %1925 = vmatmul.bf16.gmra.mxu0 %v919
        %v1926 = vpop.f32.mrf.mxu0
        %v1927 = vadd.f32 %v1037, %v1926
        %v1928 = vpop.f32.mrf.mxu0
        %v1929 = vadd.f32 %v1037, %v1928
        %1930 = vmatmul.bf16.gmra.mxu0 %v921
        %v1931 = vpop.f32.mrf.mxu0
        %v1932 = vadd.f32 %v1037, %v1931
        %v1933 = vpop.f32.mrf.mxu0
        %v1934 = vadd.f32 %v1037, %v1933
        %1935 = vmatmul.bf16.gmra.mxu0 %v923
        %v1936 = vpop.f32.mrf.mxu0
        %v1937 = vadd.f32 %v1037, %v1936
        %v1938 = vpop.f32.mrf.mxu0
        %v1939 = vadd.f32 %v1037, %v1938
        %1940 = vmatmul.bf16.gmra.mxu0 %v925
        %v1941 = vpop.f32.mrf.mxu0
        %v1942 = vadd.f32 %v1037, %v1941
        %v1943 = vpop.f32.mrf.mxu0
        %v1944 = vadd.f32 %v1037, %v1943
        %1945 = vmatmul.bf16.gmra.mxu0 %v927
        %v1946 = vpop.f32.mrf.mxu0
        %v1947 = vadd.f32 %v1037, %v1946
        %v1948 = vpop.f32.mrf.mxu0
        %v1949 = vadd.f32 %v1037, %v1948
        %1950 = vmatmul.bf16.gmra.mxu0 %v929
        %v1951 = vpop.f32.mrf.mxu0
        %v1952 = vadd.f32 %v1037, %v1951
        %v1953 = vpop.f32.mrf.mxu0
        %v1954 = vadd.f32 %v1037, %v1953
        %1955 = vmatmul.bf16.gmra.mxu0 %v931
        %v1956 = vpop.f32.mrf.mxu0
        %v1957 = vadd.f32 %v1037, %v1956
        %v1958 = vpop.f32.mrf.mxu0
        %v1959 = vadd.f32 %v1037, %v1958
        %1960 = vmatmul.bf16.gmra.mxu0 %v933
        %v1961 = vpop.f32.mrf.mxu0
        %v1962 = vadd.f32 %v1037, %v1961
        %v1963 = vpop.f32.mrf.mxu0
        %v1964 = vadd.f32 %v1037, %v1963
        %1965 = vdwg.mxu0
        %1966 = vmatpush.bf16.msra.mxu0 %v1427
        %1967 = vmatpush.bf16.msra.mxu0 %v1421
        %1968 = vmatpush.bf16.msra.mxu0 %v1415
        %1969 = vmatpush.bf16.msra.mxu0 %v1409
        %1970 = vmatpush.bf16.msra.mxu0 %v1403
        %1971 = vmatpush.bf16.msra.mxu0 %v1397
        %1972 = vmatpush.bf16.msra.mxu0 %v1391
        %1973 = vmatpush.bf16.msra.mxu0 %v1385
        %1974 = vmatmul.bf16.gmra.mxu0 %v920
        %v1975 = vpop.f32.mrf.mxu0
        %v1976 = vadd.f32 %v1927, %v1975
        %v1977 = vpop.f32.mrf.mxu0
        %v1978 = vadd.f32 %v1929, %v1977
        %1979 = vmatmul.bf16.gmra.mxu0 %v922
        %v1980 = vpop.f32.mrf.mxu0
        %v1981 = vadd.f32 %v1932, %v1980
        %v1982 = vpop.f32.mrf.mxu0
        %v1983 = vadd.f32 %v1934, %v1982
        %1984 = vmatmul.bf16.gmra.mxu0 %v924
        %v1985 = vpop.f32.mrf.mxu0
        %v1986 = vadd.f32 %v1937, %v1985
        %v1987 = vpop.f32.mrf.mxu0
        %v1988 = vadd.f32 %v1939, %v1987
        %1989 = vmatmul.bf16.gmra.mxu0 %v926
        %v1990 = vpop.f32.mrf.mxu0
        %v1991 = vadd.f32 %v1942, %v1990
        %v1992 = vpop.f32.mrf.mxu0
        %v1993 = vadd.f32 %v1944, %v1992
        %1994 = vmatmul.bf16.gmra.mxu0 %v928
        %v1995 = vpop.f32.mrf.mxu0
        %v1996 = vadd.f32 %v1947, %v1995
        %v1997 = vpop.f32.mrf.mxu0
        %v1998 = vadd.f32 %v1949, %v1997
        %1999 = vmatmul.bf16.gmra.mxu0 %v930
        %v2000 = vpop.f32.mrf.mxu0
        %v2001 = vadd.f32 %v1952, %v2000
        %v2002 = vpop.f32.mrf.mxu0
        %v2003 = vadd.f32 %v1954, %v2002
        %2004 = vmatmul.bf16.gmra.mxu0 %v932
        %v2005 = vpop.f32.mrf.mxu0
        %v2006 = vadd.f32 %v1957, %v2005
        %v2007 = vpop.f32.mrf.mxu0
        %v2008 = vadd.f32 %v1959, %v2007
        %2009 = vmatmul.bf16.gmra.mxu0 %v934
        %v2010 = vpop.f32.mrf.mxu0
        %v2011 = vadd.f32 %v1962, %v2010
        %v2012 = vpop.f32.mrf.mxu0
        %v2013 = vadd.f32 %v1964, %v2012
        %2014 = vdwg.mxu0
        %2015 = vmatpush.bf16.msra.mxu0 %v1380
        %2016 = vmatpush.bf16.msra.mxu0 %v1374
        %2017 = vmatpush.bf16.msra.mxu0 %v1368
        %2018 = vmatpush.bf16.msra.mxu0 %v1362
        %2019 = vmatpush.bf16.msra.mxu0 %v1356
        %2020 = vmatpush.bf16.msra.mxu0 %v1350
        %2021 = vmatpush.bf16.msra.mxu0 %v1344
        %2022 = vmatpush.bf16.msra.mxu0 %v1338
        %2023 = vmatmul.bf16.gmra.mxu0 %v919
        %v2024 = vpop.f32.mrf.mxu0
        %v2025 = vadd.f32 %v1038, %v2024
        %v2026 = vpop.f32.mrf.mxu0
        %v2027 = vadd.f32 %v1038, %v2026
        %2028 = vmatmul.bf16.gmra.mxu0 %v921
        %v2029 = vpop.f32.mrf.mxu0
        %v2030 = vadd.f32 %v1038, %v2029
        %v2031 = vpop.f32.mrf.mxu0
        %v2032 = vadd.f32 %v1038, %v2031
        %2033 = vmatmul.bf16.gmra.mxu0 %v923
        %v2034 = vpop.f32.mrf.mxu0
        %v2035 = vadd.f32 %v1038, %v2034
        %v2036 = vpop.f32.mrf.mxu0
        %v2037 = vadd.f32 %v1038, %v2036
        %2038 = vmatmul.bf16.gmra.mxu0 %v925
        %v2039 = vpop.f32.mrf.mxu0
        %v2040 = vadd.f32 %v1038, %v2039
        %v2041 = vpop.f32.mrf.mxu0
        %v2042 = vadd.f32 %v1038, %v2041
        %2043 = vmatmul.bf16.gmra.mxu0 %v927
        %v2044 = vpop.f32.mrf.mxu0
        %v2045 = vadd.f32 %v1038, %v2044
        %v2046 = vpop.f32.mrf.mxu0
        %v2047 = vadd.f32 %v1038, %v2046
        %2048 = vmatmul.bf16.gmra.mxu0 %v929
        %v2049 = vpop.f32.mrf.mxu0
        %v2050 = vadd.f32 %v1038, %v2049
        %v2051 = vpop.f32.mrf.mxu0
        %v2052 = vadd.f32 %v1038, %v2051
        %2053 = vmatmul.bf16.gmra.mxu0 %v931
        %v2054 = vpop.f32.mrf.mxu0
        %v2055 = vadd.f32 %v1038, %v2054
        %v2056 = vpop.f32.mrf.mxu0
        %v2057 = vadd.f32 %v1038, %v2056
        %2058 = vmatmul.bf16.gmra.mxu0 %v933
        %v2059 = vpop.f32.mrf.mxu0
        %v2060 = vadd.f32 %v1038, %v2059
        %v2061 = vpop.f32.mrf.mxu0
        %v2062 = vadd.f32 %v1038, %v2061
        %2063 = vdwg.mxu0
        %2064 = vmatpush.bf16.msra.mxu0 %v1428
        %2065 = vmatpush.bf16.msra.mxu0 %v1422
        %2066 = vmatpush.bf16.msra.mxu0 %v1416
        %2067 = vmatpush.bf16.msra.mxu0 %v1410
        %2068 = vmatpush.bf16.msra.mxu0 %v1404
        %2069 = vmatpush.bf16.msra.mxu0 %v1398
        %2070 = vmatpush.bf16.msra.mxu0 %v1392
        %2071 = vmatpush.bf16.msra.mxu0 %v1386
        %2072 = vmatmul.bf16.gmra.mxu0 %v920
        %v2073 = vpop.f32.mrf.mxu0
        %v2074 = vadd.f32 %v2025, %v2073
        %v2075 = vpop.f32.mrf.mxu0
        %v2076 = vadd.f32 %v2027, %v2075
        %2077 = vmatmul.bf16.gmra.mxu0 %v922
        %v2078 = vpop.f32.mrf.mxu0
        %v2079 = vadd.f32 %v2030, %v2078
        %v2080 = vpop.f32.mrf.mxu0
        %v2081 = vadd.f32 %v2032, %v2080
        %2082 = vmatmul.bf16.gmra.mxu0 %v924
        %v2083 = vpop.f32.mrf.mxu0
        %v2084 = vadd.f32 %v2035, %v2083
        %v2085 = vpop.f32.mrf.mxu0
        %v2086 = vadd.f32 %v2037, %v2085
        %2087 = vmatmul.bf16.gmra.mxu0 %v926
        %v2088 = vpop.f32.mrf.mxu0
        %v2089 = vadd.f32 %v2040, %v2088
        %v2090 = vpop.f32.mrf.mxu0
        %v2091 = vadd.f32 %v2042, %v2090
        %2092 = vmatmul.bf16.gmra.mxu0 %v928
        %v2093 = vpop.f32.mrf.mxu0
        %v2094 = vadd.f32 %v2045, %v2093
        %v2095 = vpop.f32.mrf.mxu0
        %v2096 = vadd.f32 %v2047, %v2095
        %2097 = vmatmul.bf16.gmra.mxu0 %v930
        %v2098 = vpop.f32.mrf.mxu0
        %v2099 = vadd.f32 %v2050, %v2098
        %v2100 = vpop.f32.mrf.mxu0
        %v2101 = vadd.f32 %v2052, %v2100
        %2102 = vmatmul.bf16.gmra.mxu0 %v932
        %v2103 = vpop.f32.mrf.mxu0
        %v2104 = vadd.f32 %v2055, %v2103
        %v2105 = vpop.f32.mrf.mxu0
        %v2106 = vadd.f32 %v2057, %v2105
        %2107 = vmatmul.bf16.gmra.mxu0 %v934
        %v2108 = vpop.f32.mrf.mxu0
        %v2109 = vadd.f32 %v2060, %v2108
        %v2110 = vpop.f32.mrf.mxu0
        %v2111 = vadd.f32 %v2062, %v2110
        %2112 = vdwg.mxu0
        %v2113 = vmul.f32 %v1584, 0.088388346
        %v2114 = vmul.f32 %v1682, 0.088388346
        %v2115 = vmul.f32 %v1586, 0.088388346
        %v2116 = vmul.f32 %v1684, 0.088388346
        %v2117 = vmul.f32 %v1589, 0.088388346
        %v2118 = vmul.f32 %v1687, 0.088388346
        %v2119 = vmul.f32 %v1591, 0.088388346
        %v2120 = vmul.f32 %v1689, 0.088388346
        %v2121 = vmul.f32 %v1594, 0.088388346
        %v2122 = vmul.f32 %v1692, 0.088388346
        %v2123 = vmul.f32 %v1596, 0.088388346
        %v2124 = vmul.f32 %v1694, 0.088388346
        %v2125 = vmul.f32 %v1599, 0.088388346
        %v2126 = vmul.f32 %v1697, 0.088388346
        %v2127 = vmul.f32 %v1601, 0.088388346
        %v2128 = vmul.f32 %v1699, 0.088388346
        %v2129 = vmul.f32 %v1604, 0.088388346
        %v2130 = vmul.f32 %v1702, 0.088388346
        %v2131 = vmul.f32 %v1606, 0.088388346
        %v2132 = vmul.f32 %v1704, 0.088388346
        %v2133 = vmul.f32 %v1609, 0.088388346
        %v2134 = vmul.f32 %v1707, 0.088388346
        %v2135 = vmul.f32 %v1611, 0.088388346
        %v2136 = vmul.f32 %v1709, 0.088388346
        %v2137 = vmul.f32 %v1614, 0.088388346
        %v2138 = vmul.f32 %v1712, 0.088388346
        %v2139 = vmul.f32 %v1616, 0.088388346
        %v2140 = vmul.f32 %v1714, 0.088388346
        %v2141 = vmul.f32 %v1619, 0.088388346
        %v2142 = vmul.f32 %v1717, 0.088388346
        %v2143 = vmul.f32 %v1621, 0.088388346
        %v2144 = vmul.f32 %v1719, 0.088388346
        %v2145 = vpack.c.bf16 %v2114, %v2113
        %v2146 = vpack.c.bf16 %v2116, %v2115
        %v2147 = vpack.c.bf16 %v2118, %v2117
        %v2148 = vpack.c.bf16 %v2120, %v2119
        %v2149 = vpack.c.bf16 %v2122, %v2121
        %v2150 = vpack.c.bf16 %v2124, %v2123
        %v2151 = vpack.c.bf16 %v2126, %v2125
        %v2152 = vpack.c.bf16 %v2128, %v2127
        %v2153 = vpack.c.bf16 %v2130, %v2129
        %v2154 = vpack.c.bf16 %v2132, %v2131
        %v2155 = vpack.c.bf16 %v2134, %v2133
        %v2156 = vpack.c.bf16 %v2136, %v2135
        %v2157 = vpack.c.bf16 %v2138, %v2137
        %v2158 = vpack.c.bf16 %v2140, %v2139
        %v2159 = vpack.c.bf16 %v2142, %v2141
        %v2160 = vpack.c.bf16 %v2144, %v2143
        %2161 = vst [vmem:[%s385] sm:$0xff] %v2145
        %2162 = vst [vmem:[%s385 + $0x8] sm:$0xff] %v2146
        %2163 = vst [vmem:[%s385 + $0x10] sm:$0xff] %v2147
        %2164 = vst [vmem:[%s385 + $0x18] sm:$0xff] %v2148
        %2165 = vst [vmem:[%s385 + $0x20] sm:$0xff] %v2149
        %2166 = vst [vmem:[%s385 + $0x28] sm:$0xff] %v2150
        %2167 = vst [vmem:[%s385 + $0x30] sm:$0xff] %v2151
        %2168 = vst [vmem:[%s385 + $0x38] sm:$0xff] %v2152
        %2169 = vst [vmem:[%s385 + $0x40] sm:$0xff] %v2153
        %2170 = vst [vmem:[%s385 + $0x48] sm:$0xff] %v2154
        %2171 = vst [vmem:[%s385 + $0x50] sm:$0xff] %v2155
        %2172 = vst [vmem:[%s385 + $0x58] sm:$0xff] %v2156
        %2173 = vst [vmem:[%s385 + $0x60] sm:$0xff] %v2157
        %2174 = vst [vmem:[%s385 + $0x68] sm:$0xff] %v2158
        %2175 = vst [vmem:[%s385 + $0x70] sm:$0xff] %v2159
        %2176 = vst [vmem:[%s385 + $0x78] sm:$0xff] %v2160
        %v2177 = vpack.c.bf16 %v1878, %v1780
        %v2178 = vpack.c.bf16 %v1880, %v1782
        %v2179 = vpack.c.bf16 %v1883, %v1785
        %v2180 = vpack.c.bf16 %v1885, %v1787
        %v2181 = vpack.c.bf16 %v1888, %v1790
        %v2182 = vpack.c.bf16 %v1890, %v1792
        %v2183 = vpack.c.bf16 %v1893, %v1795
        %v2184 = vpack.c.bf16 %v1895, %v1797
        %v2185 = vpack.c.bf16 %v1898, %v1800
        %v2186 = vpack.c.bf16 %v1900, %v1802
        %v2187 = vpack.c.bf16 %v1903, %v1805
        %v2188 = vpack.c.bf16 %v1905, %v1807
        %v2189 = vpack.c.bf16 %v1908, %v1810
        %v2190 = vpack.c.bf16 %v1910, %v1812
        %v2191 = vpack.c.bf16 %v1913, %v1815
        %v2192 = vpack.c.bf16 %v1915, %v1817
        %2193 = vst [vmem:[%s392] sm:$0xff] %v2177
        %2194 = vst [vmem:[%s392 + $0x8] sm:$0xff] %v2178
        %2195 = vst [vmem:[%s392 + $0x10] sm:$0xff] %v2179
        %2196 = vst [vmem:[%s392 + $0x18] sm:$0xff] %v2180
        %2197 = vst [vmem:[%s392 + $0x20] sm:$0xff] %v2181
        %2198 = vst [vmem:[%s392 + $0x28] sm:$0xff] %v2182
        %2199 = vst [vmem:[%s392 + $0x30] sm:$0xff] %v2183
        %2200 = vst [vmem:[%s392 + $0x38] sm:$0xff] %v2184
        %2201 = vst [vmem:[%s392 + $0x40] sm:$0xff] %v2185
        %2202 = vst [vmem:[%s392 + $0x48] sm:$0xff] %v2186
        %2203 = vst [vmem:[%s392 + $0x50] sm:$0xff] %v2187
        %2204 = vst [vmem:[%s392 + $0x58] sm:$0xff] %v2188
        %2205 = vst [vmem:[%s392 + $0x60] sm:$0xff] %v2189
        %2206 = vst [vmem:[%s392 + $0x68] sm:$0xff] %v2190
        %2207 = vst [vmem:[%s392 + $0x70] sm:$0xff] %v2191
        %2208 = vst [vmem:[%s392 + $0x78] sm:$0xff] %v2192
        %v2209 = vpack.c.bf16 %v2074, %v1976
        %v2210 = vpack.c.bf16 %v2076, %v1978
        %v2211 = vpack.c.bf16 %v2079, %v1981
        %v2212 = vpack.c.bf16 %v2081, %v1983
        %v2213 = vpack.c.bf16 %v2084, %v1986
        %v2214 = vpack.c.bf16 %v2086, %v1988
        %v2215 = vpack.c.bf16 %v2089, %v1991
        %v2216 = vpack.c.bf16 %v2091, %v1993
        %v2217 = vpack.c.bf16 %v2094, %v1996
        %v2218 = vpack.c.bf16 %v2096, %v1998
        %v2219 = vpack.c.bf16 %v2099, %v2001
        %v2220 = vpack.c.bf16 %v2101, %v2003
        %v2221 = vpack.c.bf16 %v2104, %v2006
        %v2222 = vpack.c.bf16 %v2106, %v2008
        %v2223 = vpack.c.bf16 %v2109, %v2011
        %v2224 = vpack.c.bf16 %v2111, %v2013
        %2225 = vst [vmem:[%s399] sm:$0xff] %v2209
        %2226 = vst [vmem:[%s399 + $0x8] sm:$0xff] %v2210
        %2227 = vst [vmem:[%s399 + $0x10] sm:$0xff] %v2211
        %2228 = vst [vmem:[%s399 + $0x18] sm:$0xff] %v2212
        %2229 = vst [vmem:[%s399 + $0x20] sm:$0xff] %v2213
        %2230 = vst [vmem:[%s399 + $0x28] sm:$0xff] %v2214
        %2231 = vst [vmem:[%s399 + $0x30] sm:$0xff] %v2215
        %2232 = vst [vmem:[%s399 + $0x38] sm:$0xff] %v2216
        %2233 = vst [vmem:[%s399 + $0x40] sm:$0xff] %v2217
        %2234 = vst [vmem:[%s399 + $0x48] sm:$0xff] %v2218
        %2235 = vst [vmem:[%s399 + $0x50] sm:$0xff] %v2219
        %2236 = vst [vmem:[%s399 + $0x58] sm:$0xff] %v2220
        %2237 = vst [vmem:[%s399 + $0x60] sm:$0xff] %v2221
        %2238 = vst [vmem:[%s399 + $0x68] sm:$0xff] %v2222
        %2239 = vst [vmem:[%s399 + $0x70] sm:$0xff] %v2223
        %2240 = vst [vmem:[%s399 + $0x78] sm:$0xff] %v2224
        %s2241 = sand.u32 %s164, 1
        %s2242 = scalar_lea.sflag [#allocation4], %s2241
        %s2243 = sand.u32 %s164, 1
        %s2244 = smul.addr %s2243, 128
        %s2245 = scalar_lea.vmem [#allocation11], %s2244
        %s2246 = sand.u32 %s30, 1
        %s2247 = scalar_lea.sflag [#allocation13], %s2246
        %s2248 = sand.u32 %s192, 1
        %s2249 = smul.addr %s2248, 128
        %s2250 = scalar_lea.vmem [#allocation12], %s2249
        %s2251 = sand.u32 %s30, 1
        %s2252 = scalar_lea.sflag [#allocation13], %s2251
        %s2253 = sand.u32 %s220, 1
        %s2254 = smul.addr %s2253, 128
        %s2255 = scalar_lea.vmem [#allocation14], %s2254
        // Predicated region
        $region61: #{tpu_custom_call.1} parent=39 // pred_check
          %p2256 = pneg %p174
        $region62: #{tpu_custom_call.1} parent=39 // pred_check_branch
          %2258 = sbr.rel (%p2256) target = $region64
        $region63: #{tpu_custom_call.1} parent=39 // pred_region
          %s2259 = smul.u32 16, %s35
          %2261 = vsyncadd %s2242, 0
          %s2262 = smul.addr %s2259, 2
          %s2263 = smul.addr %s34, 64
          %s2264 = sadd.s32 %s2262, %s2263
          %s2265 = smul.addr %s2264, 4
          %s2266 = scalar_lea.hbm %s5, %s2265
          %s2267 = sshll.u32 %s2245, 4
          %s2268 = int_to_ptr.vmem [resolvable:$true] %s2267
          %s2269 = sshll.u32 %s2266, 4
          %s2270 = int_to_ptr.hbm [resolvable:$true] %s2269
          %2275 = dma.vmem_to_hbm [thread:$0]  %s2268, 2048, %s2270, %s2242, 128, 128, 8
        $region64: #{tpu_custom_call.1} parent=39 // pred_fallthru
          _
        // Predicated region
        $region65: #{tpu_custom_call.1} parent=39 // pred_check
          %p2276 = pneg %p202
        $region66: #{tpu_custom_call.1} parent=39 // pred_check_branch
          %2278 = sbr.rel (%p2276) target = $region68
        $region67: #{tpu_custom_call.1} parent=39 // pred_region
          %s2279 = smul.u32 16, %s35
          %2281 = vsyncadd %s2247, 0
          %s2282 = smul.addr %s2279, 2
          %s2283 = smul.addr %s34, 64
          %s2284 = sadd.s32 %s2282, %s2283
          %s2285 = smul.addr %s2284, 4
          %s2286 = scalar_lea.hbm %s6, %s2285
          %s2287 = sshll.u32 %s2250, 4
          %s2288 = int_to_ptr.vmem [resolvable:$true] %s2287
          %s2289 = sshll.u32 %s2286, 4
          %s2290 = int_to_ptr.hbm [resolvable:$true] %s2289
          %2295 = dma.vmem_to_hbm [thread:$0]  %s2288, 2048, %s2290, %s2247, 128, 128, 8
        $region68: #{tpu_custom_call.1} parent=39 // pred_fallthru
          _
        // Predicated region
        $region69: #{tpu_custom_call.1} parent=39 // pred_check
          %p2296 = pneg %p230
        $region70: #{tpu_custom_call.1} parent=39 // pred_check_branch
          %2298 = sbr.rel (%p2296) target = $region72
        $region71: #{tpu_custom_call.1} parent=39 // pred_region
          %s2299 = smul.u32 16, %s35
          %2301 = vsyncadd %s2252, 0
          %s2302 = smul.addr %s2299, 2
          %s2303 = smul.addr %s34, 64
          %s2304 = sadd.s32 %s2302, %s2303
          %s2305 = smul.addr %s2304, 4
          %s2306 = scalar_lea.hbm %s7, %s2305
          %s2307 = sshll.u32 %s2255, 4
          %s2308 = int_to_ptr.vmem [resolvable:$true] %s2307
          %s2309 = sshll.u32 %s2306, 4
          %s2310 = int_to_ptr.hbm [resolvable:$true] %s2309
          %2315 = dma.vmem_to_hbm [thread:$0]  %s2308, 2048, %s2310, %s2252, 128, 128, 8
        $region72: #{tpu_custom_call.1} parent=39 // pred_fallthru
          _
      $region40: #{tpu_custom_call.1} parent=5 // pred_fallthru
        _
      %p2316 = scmp.le.s32.totalorder 2, %s25
      // Predicated region
      $region73: #{tpu_custom_call.1} parent=5 // pred_check
        %p2317 = pneg %p2316
      $region74: #{tpu_custom_call.1} parent=5 // pred_check_branch
        %2319 = sbr.rel (%p2317) target = $region76
      $region75: #{tpu_custom_call.1} parent=5 // pred_region
        %s2320 = ssub.s32 %s25, 2
        // Predicated region
        $region77: #{tpu_custom_call.1} parent=75 // pred_check
          %p2321 = pneg %p180
        $region78: #{tpu_custom_call.1} parent=75 // pred_check_branch
          %2323 = sbr.rel (%p2321) target = $region80
        $region79: #{tpu_custom_call.1} parent=75 // pred_region
          %s2324 = sand.u32 %s165, 1
          %s2325 = scalar_lea.sflag [#allocation4], %s2324
          %s2326 = sand.u32 %s165, 1
          %s2327 = smul.addr %s2326, 128
          %s2328 = scalar_lea.vmem [#allocation11], %s2327
          %2330 = dma.done %s2325, 2048
        $region80: #{tpu_custom_call.1} parent=75 // pred_fallthru
          _
        // Predicated region
        $region81: #{tpu_custom_call.1} parent=75 // pred_check
          %p2331 = pneg %p208
        $region82: #{tpu_custom_call.1} parent=75 // pred_check_branch
          %2333 = sbr.rel (%p2331) target = $region84
        $region83: #{tpu_custom_call.1} parent=75 // pred_region
          %s2334 = sand.u32 %s31, 1
          %s2335 = scalar_lea.sflag [#allocation13], %s2334
          %s2336 = sand.u32 %s193, 1
          %s2337 = smul.addr %s2336, 128
          %s2338 = scalar_lea.vmem [#allocation12], %s2337
          %2340 = dma.done %s2335, 2048
        $region84: #{tpu_custom_call.1} parent=75 // pred_fallthru
          _
        // Predicated region
        $region85: #{tpu_custom_call.1} parent=75 // pred_check
          %p2341 = pneg %p236
        $region86: #{tpu_custom_call.1} parent=75 // pred_check_branch
          %2343 = sbr.rel (%p2341) target = $region88
        $region87: #{tpu_custom_call.1} parent=75 // pred_region
          %s2344 = sand.u32 %s31, 1
          %s2345 = scalar_lea.sflag [#allocation13], %s2344
          %s2346 = sand.u32 %s221, 1
          %s2347 = smul.addr %s2346, 128
          %s2348 = scalar_lea.vmem [#allocation14], %s2347
          %2350 = dma.done %s2345, 2048
        $region88: #{tpu_custom_call.1} parent=75 // pred_fallthru
          _
      $region76: #{tpu_custom_call.1} parent=5 // pred_fallthru
        _
    $region6: #{tpu_custom_call.1} parent=1 // loop_footer
      %s29 = sadd.s32 1, %s25
    $region7: #{tpu_custom_call.1} parent=1 // loop_footer_branch
      %24 = sbr.rel target = $region3
    $region8: #{tpu_custom_call.1} parent=1 // loop_exit
      _
    %2351 = vsyncpa [#allocation3], 1
    %s2352 = scalar_lea.sflag [#allocation3], 1
    %2353 = vsyncpa %s2352, 1
    %2354 = vsyncpa [#allocation6], 1
    %2355 = vsyncpa [#allocation9], 1
    %2356 = vsyncpa [#allocation4], 1
    %s2357 = scalar_lea.sflag [#allocation4], 1
    %2358 = vsyncpa %s2357, 1
    %2359 = vsyncpa [#allocation13], 1
    %s2360 = scalar_lea.sflag [#allocation13], 1
    %2361 = vsyncpa %s2360, 1

</llo_original>
